<compile_context>
chip_gen: v5e
topology: v5e:2x2
jax: 0.10.0
libtpu: 0.0.40
codegen_flags: <defaults>
</compile_context>

<pallas_src>
import functools

import jax
import jax.numpy as jnp
import numpy as np
from jax.experimental import pallas as pl
from jax.experimental.pallas import tpu as pltpu

D_MODEL = 128
NUM_CLASSES = 2
IN_CHANNELS = 5            # one-hot DNA channels
C_PAD = 8                  # channels zero-padded to 8 for clean tiling
K1, PAD1 = 3, 1            # Conv1d(D, D, kernel_size=3, padding=1)
K2, PAD2 = 5, 2            # Conv1d(D, D, kernel_size=5, padding=2)

# Halo rows kept on each side of an L tile.  Chosen sublane-aligned so every
# edge-zero store and every buffer row count is a multiple of 8.
H_H1 = 8                   # conv1-output halo (needs >= PAD2)
H_EMB = 16                 # embedding halo     (needs >= H_H1 + PAD1)
LT_MAX = 2048              # max rows per L tile (~8 MiB peak live VMEM)


def _conv_relu(src_ref, w_ref, b_ref, *, ksize, off, rows):
    """Channels-last Conv1d(D->D) + ReLU over `rows` output rows.

    src_ref : [S, D] f32 halo'd buffer; tap k reads rows [off+k, off+k+rows).
    w_ref   : [ksize*D, D] bf16, tap-major (rows k*D:(k+1)*D == W_k[Cin, Cout]).
    b_ref   : [1, D] f32.

    Taps are paired into 256-deep MXU contractions (f32 accumulation across
    chunks).  The pair is concatenated in f32 (aligned relayout) and cast to
    bf16 once per chunk, right before the dot.
    """
    d = w_ref.shape[-1]
    acc = None
    k = 0
    while k < ksize:
        nk = min(2, ksize - k)
        if nk == 2:
            lhs = jnp.concatenate(
                [src_ref[off + k:off + k + rows, :],
                 src_ref[off + k + 1:off + k + 1 + rows, :]], axis=-1)
        else:
            lhs = src_ref[off + k:off + k + rows, :]
        part = jnp.dot(lhs.astype(jnp.bfloat16), w_ref[k * d:(k + nk) * d, :],
                       preferred_element_type=jnp.float32)
        acc = part if acc is None else acc + part
        k += nk
    return jnp.maximum(acc + b_ref[...], 0.0)                     # [rows, D] f32


def hyena_kernel(x_ref, wemb_ref, bemb_ref, w1_ref, b1_ref, w2_ref, b2_ref,
                 out_ref, emb_ref, h1_ref, acc_ref, *, lt, inv_len):
    """One (sequence, L-tile) per grid step.

    x_ref    : [lt + 2*H_EMB, 8]    int8  (one-hot, halo'd window)
    wemb_ref : [8, D] f32           bemb_ref : [1, D] f32
    w1_ref   : [3*D, D] bf16        b1_ref   : [1, D] f32
    w2_ref   : [5*D, D] bf16        b2_ref   : [1, D] f32
    out_ref  : [1, D] f32           pooled features for this sequence
    emb_ref  : [lt + 2*H_EMB, D] f32 scratch (embedding + halo)
    h1_ref   : [lt + 2*H_H1,  D] f32 scratch (conv1 output + halo)
    acc_ref  : [1, D] f32 scratch   running pool sum across L tiles
    """
    l = pl.program_id(1)
    nl = pl.num_programs(1)
    d = emb_ref.shape[-1]

    # ---- embedding: Linear(5 -> D), f32 (tiny K=8 matmul) -------------------
    x = x_ref[...].astype(jnp.int32).astype(jnp.float32)
    emb_ref[...] = jnp.dot(x, wemb_ref[...],
                           preferred_element_type=jnp.float32) + bemb_ref[...]

    # Conv zero-padding semantics at the sequence ends: halo rows whose global
    # index falls outside [0, L) must be zero.  Only the first / last L tile
    # pays for this; interior tiles are completely mask-free.
    @pl.when(l == 0)
    def _():
        emb_ref[0:H_EMB, :] = jnp.zeros((H_EMB, d), jnp.float32)

    @pl.when(l == nl - 1)
    def _():
        emb_ref[lt + H_EMB:lt + 2 * H_EMB, :] = jnp.zeros((H_EMB, d), jnp.float32)

    # ---- Conv1d(D, D, k=3, pad=1) + ReLU over lt + 2*H_H1 rows --------------
    h1_ref[...] = _conv_relu(emb_ref, w1_ref, b1_ref,
                             ksize=K1, off=H_EMB - H_H1 - PAD1,
                             rows=lt + 2 * H_H1)

    @pl.when(l == 0)
    def _():
        h1_ref[0:H_H1, :] = jnp.zeros((H_H1, d), jnp.float32)

    @pl.when(l == nl - 1)
    def _():
        h1_ref[lt + H_H1:lt + 2 * H_H1, :] = jnp.zeros((H_H1, d), jnp.float32)

    # ---- Conv1d(D, D, k=5, pad=2) + ReLU over the lt interior rows ----------
    h2 = _conv_relu(h1_ref, w2_ref, b2_ref,
                    ksize=K2, off=H_H1 - PAD2, rows=lt)            # [lt, D] f32

    # ---- AdaptiveAvgPool1d(1): accumulate the mean across L tiles -----------
    @pl.when(l == 0)
    def _():
        acc_ref[...] = jnp.zeros_like(acc_ref)

    acc_ref[...] += jnp.sum(h2, axis=0, keepdims=True)

    @pl.when(l == nl - 1)
    def _():
        out_ref[...] = acc_ref[...] * inv_len


def _pick_lt(L):
    """Largest divisor of L that is a multiple of 8 and <= LT_MAX."""
    if L <= LT_MAX:
        return L
    for cand in range(LT_MAX, 7, -8):
        if L % cand == 0:
            return cand
    return L


def hyena_dna_forward(x, params, *, lt=None):
    """x: [B, L, 5] float32 one-hot -> logits [B, num_classes]."""
    B, L, C = x.shape
    D = params["w_emb"].shape[1]
    assert L % 8 == 0, "sequence length must be a multiple of 8"
    if lt is None:
        lt = _pick_lt(L)
    assert lt % 8 == 0 and L % lt == 0
    n_l = L // lt
    s_e = lt + 2 * H_EMB

    # ---- input: one-hot as int8, channel-padded to 8, halo'd L windows ------
    x8 = jnp.pad(x.astype(jnp.int8), ((0, 0), (H_EMB, H_EMB), (0, C_PAD - C)))
    win = jnp.arange(n_l)[:, None] * lt + jnp.arange(s_e)[None, :]   # [n_l, s_e]
    x_win = x8[:, win, :]                                            # [B, n_l, s_e, 8]

    bf16 = jnp.bfloat16
    w_emb = jnp.pad(params["w_emb"], ((0, C_PAD - C), (0, 0)))       # [8, D] f32
    w1f = params["w1"].reshape(K1 * D, D).astype(bf16)               # [3D, D] tap-major
    w2f = params["w2"].reshape(K2 * D, D).astype(bf16)               # [5D, D]

    pooled = pl.pallas_call(
        functools.partial(hyena_kernel, lt=lt, inv_len=1.0 / L),
        out_shape=jax.ShapeDtypeStruct((B, 1, D), jnp.float32),
        grid=(B, n_l),
        in_specs=[
            pl.BlockSpec((None, None, s_e, C_PAD), lambda b, l: (b, l, 0, 0)),
            pl.BlockSpec((C_PAD, D), lambda b, l: (0, 0)),           # w_emb (f32)
            pl.BlockSpec((1, D), lambda b, l: (0, 0)),               # b_emb
            pl.BlockSpec((K1 * D, D), lambda b, l: (0, 0)),          # w1 (bf16)
            pl.BlockSpec((1, D), lambda b, l: (0, 0)),               # b1
            pl.BlockSpec((K2 * D, D), lambda b, l: (0, 0)),          # w2 (bf16)
            pl.BlockSpec((1, D), lambda b, l: (0, 0)),               # b2
        ],
        out_specs=pl.BlockSpec((None, 1, D), lambda b, l: (b, 0, 0)),
        scratch_shapes=[
            pltpu.VMEM((lt + 2 * H_EMB, D), jnp.float32),   # embedding halo buffer
            pltpu.VMEM((lt + 2 * H_H1, D), jnp.float32),    # conv1-output halo buffer
            pltpu.VMEM((1, D), jnp.float32),                # running pool sum
        ],
        compiler_params=pltpu.CompilerParams(
            dimension_semantics=("parallel", "arbitrary"),
            vmem_limit_bytes=32 * 1024 * 1024),
    )(x_win, w_emb, params["b_emb"], w1f, params["b1"], w2f, params["b2"])

    pooled = pooled[:, 0, :]                                         # [B, D]
    # Tiny D -> num_classes classifier stays in XLA (keeps the kernel output
    # lane-dense and avoids an M=1/N=2 MXU pass per grid step).
    return pooled @ params["w_cls"] + params["b_cls"]                # [B, C]


def init_params(key, d_model=D_MODEL, num_classes=NUM_CLASSES):
    ks = jax.random.split(key, 8)
    s = 0.05
    return {
        # embedding: Linear(5, D), stored as [in, out]
        "w_emb": s * jax.random.normal(ks[0], (IN_CHANNELS, d_model), jnp.float32),
        "b_emb": s * jax.random.normal(ks[1], (1, d_model), jnp.float32),
        # conv1/conv2 weights stored [tap, C_in, C_out] (== torch weight[o,i,k].T per tap)
        "w1": s * jax.random.normal(ks[2], (K1, d_model, d_model), jnp.float32),
        "b1": s * jax.random.normal(ks[3], (1, d_model), jnp.float32),
        "w2": s * jax.random.normal(ks[4], (K2, d_model, d_model), jnp.float32),
        "b2": s * jax.random.normal(ks[5], (1, d_model), jnp.float32),
        # classifier: Linear(D, num_classes)
        "w_cls": s * jax.random.normal(ks[6], (d_model, num_classes), jnp.float32),
        "b_cls": s * jax.random.normal(ks[7], (1, num_classes), jnp.float32),
    }


def reference_forward(x, p):
    """Pure-JAX reference mirroring the kernel numerics (f32 embedding, bf16
    conv inputs/weights with f32 accumulation) with explicit zero-padded convs
    — an independent check of the halo / L-tiling path."""
    f32, bf16 = jnp.float32, jnp.bfloat16
    L = x.shape[1]
    hi = jax.lax.Precision.HIGHEST

    h = jnp.einsum("blc,cd->bld", x.astype(f32), p["w_emb"],
                   precision=hi) + p["b_emb"][None]                  # [B, L, D]
    # conv1 (k=3, pad=1)
    hp = jnp.pad(h, ((0, 0), (PAD1, PAD1), (0, 0)))
    y = p["b1"][None] + sum(
        jnp.einsum("bld,de->ble", hp[:, k:k + L].astype(bf16),
                   p["w1"][k].astype(bf16), preferred_element_type=f32)
        for k in range(K1))
    h = jnp.maximum(y, 0.0)
    # conv2 (k=5, pad=2)
    hp = jnp.pad(h, ((0, 0), (PAD2, PAD2), (0, 0)))
    y = p["b2"][None] + sum(
        jnp.einsum("bld,de->ble", hp[:, k:k + L].astype(bf16),
                   p["w2"][k].astype(bf16), preferred_element_type=f32)
        for k in range(K2))
    h = jnp.maximum(y, 0.0)
    pooled = jnp.mean(h, axis=1)                                     # [B, D]
    return pooled @ p["w_cls"] + p["b_cls"]                          # [B, C]


if __name__ == "__main__":
    key = jax.random.PRNGKey(0)
    kx, kp = jax.random.split(key)

    batch, seq_len = 2, 96
    # one-hot DNA input [B, L, 5]
    idx = jax.random.randint(kx, (batch, seq_len), 0, IN_CHANNELS)
    x = jax.nn.one_hot(idx, IN_CHANNELS, dtype=jnp.float32)

    params = init_params(kp)
    ref = reference_forward(x, params)

    # L-tiled path: 3 sequence tiles of 32 (left edge / interior / right edge).
    logits = jax.block_until_ready(hyena_dna_forward(x, params, lt=32))
    np.testing.assert_allclose(np.asarray(logits), np.asarray(ref),
                               rtol=2e-3, atol=2e-4)

    # Single-tile path (lt == L).
    logits1 = jax.block_until_ready(hyena_dna_forward(x, params))
    np.testing.assert_allclose(np.asarray(logits1), np.asarray(ref),
                               rtol=2e-3, atol=2e-4)

    assert logits.shape == (batch, NUM_CLASSES)
    print("KERNEL_OK")
</pallas_src>

<mosaic_0001>
module attributes {stable_mosaic.version = 11 : i64} {
  func.func @hyena_kernel(%arg0: i32, %arg1: i32, %arg2: memref<1x1x64x8xi8, #tpu.memory_space<vmem>>, %arg3: memref<8x128xf32, #tpu.memory_space<vmem>>, %arg4: memref<1x128xf32, #tpu.memory_space<vmem>>, %arg5: memref<384x128xbf16, #tpu.memory_space<vmem>>, %arg6: memref<1x128xf32, #tpu.memory_space<vmem>>, %arg7: memref<640x128xbf16, #tpu.memory_space<vmem>>, %arg8: memref<1x128xf32, #tpu.memory_space<vmem>>, %arg9: memref<1x1x128xf32, #tpu.memory_space<vmem>>, %arg10: memref<64x128xf32, #tpu.memory_space<vmem>>, %arg11: memref<48x128xf32, #tpu.memory_space<vmem>>, %arg12: memref<1x128xf32, #tpu.memory_space<vmem>>) attributes {dimension_semantics = [#tpu.dimension_semantics<parallel>, #tpu.dimension_semantics<arbitrary>], iteration_bounds = array<i64: 2, 3>, scalar_prefetch = 0 : i64, scratch_operands = 3 : i64, tpu.core_type = #tpu.core_type<tc>, window_params = [{transform_indices = @transform_0, window_bounds = array<i64: 1, 1, 64, 8>}, {pipeline_mode = #tpu.pipeline_mode<synchronous>, transform_indices = @transform_1, window_bounds = array<i64: 8, 128>}, {pipeline_mode = #tpu.pipeline_mode<synchronous>, transform_indices = @transform_2, window_bounds = array<i64: 1, 128>}, {pipeline_mode = #tpu.pipeline_mode<synchronous>, transform_indices = @transform_3, window_bounds = array<i64: 384, 128>}, {pipeline_mode = #tpu.pipeline_mode<synchronous>, transform_indices = @transform_4, window_bounds = array<i64: 1, 128>}, {pipeline_mode = #tpu.pipeline_mode<synchronous>, transform_indices = @transform_5, window_bounds = array<i64: 640, 128>}, {pipeline_mode = #tpu.pipeline_mode<synchronous>, transform_indices = @transform_6, window_bounds = array<i64: 1, 128>}, {transform_indices = @transform_7, window_bounds = array<i64: 1, 1, 128>}]} {
    %c0 = arith.constant 0 : index
    %c0_0 = arith.constant 0 : index
    %c0_1 = arith.constant 0 : index
    %c0_2 = arith.constant 0 : index
    %0 = vector.load %arg2[%c0, %c0_0, %c0_1, %c0_2] : memref<1x1x64x8xi8, #tpu.memory_space<vmem>>, vector<1x1x64x8xi8>
    %1 = vector.shape_cast %0 : vector<1x1x64x8xi8> to vector<64x8xi8>
    %2 = arith.extsi %1 : vector<64x8xi8> to vector<64x8xi32>
    %3 = arith.sitofp %2 : vector<64x8xi32> to vector<64x8xf32>
    %c0_3 = arith.constant 0 : index
    %c0_4 = arith.constant 0 : index
    %4 = vector.load %arg3[%c0_3, %c0_4] : memref<8x128xf32, #tpu.memory_space<vmem>>, vector<8x128xf32>
    %cst = arith.constant dense<0.000000e+00> : vector<64x128xf32>
    %5 = tpu.matmul %3, %4, %cst {dimension_numbers = #tpu.dot_dimension_numbers<[1], [0], [0], [1], [0, 0, 1, 1], [], []>} : vector<64x8xf32>, vector<8x128xf32>, vector<64x128xf32> -> vector<64x128xf32>
    %c0_5 = arith.constant 0 : index
    %c0_6 = arith.constant 0 : index
    %6 = vector.load %arg4[%c0_5, %c0_6] : memref<1x128xf32, #tpu.memory_space<vmem>>, vector<1x128xf32>
    %7 = vector.broadcast %6 : vector<1x128xf32> to vector<64x128xf32>
    %8 = arith.addf %5, %7 : vector<64x128xf32>
    %c0_7 = arith.constant 0 : index
    %c0_8 = arith.constant 0 : index
    %9 = vector.load %arg10[%c0_7, %c0_8] : memref<64x128xf32, #tpu.memory_space<vmem>>, vector<64x128xf32>
    tpu.vector_store %arg10[%c0_7, %c0_8], %8 {strides = array<i32>} : memref<64x128xf32, #tpu.memory_space<vmem>>, vector<64x128xf32>,
    %c0_i32 = arith.constant 0 : i32
    %10 = arith.cmpi eq, %arg1, %c0_i32 : i32
    %11 = arith.extui %10 : i1 to i32
    %c0_i32_9 = arith.constant 0 : i32
    %12 = arith.cmpi ne, %11, %c0_i32_9 : i32
    scf.if %12 {
      %cst_56 = arith.constant 0.000000e+00 : f32
      %73 = vector.broadcast %cst_56 : f32 to vector<16x128xf32>
      %c0_57 = arith.constant 0 : index
      %c0_58 = arith.constant 0 : index
      %74 = vector.load %arg10[%c0_57, %c0_58] : memref<64x128xf32, #tpu.memory_space<vmem>>, vector<16x128xf32>
      tpu.vector_store %arg10[%c0_57, %c0_58], %73 {strides = array<i32>} : memref<64x128xf32, #tpu.memory_space<vmem>>, vector<16x128xf32>,
    } else {
    }
    %c2_i32 = arith.constant 2 : i32
    %13 = arith.cmpi eq, %arg1, %c2_i32 : i32
    %14 = arith.extui %13 : i1 to i32
    %c0_i32_10 = arith.constant 0 : i32
    %15 = arith.cmpi ne, %14, %c0_i32_10 : i32
    scf.if %15 {
      %cst_56 = arith.constant 0.000000e+00 : f32
      %73 = vector.broadcast %cst_56 : f32 to vector<16x128xf32>
      %c48 = arith.constant 48 : index
      %c0_57 = arith.constant 0 : index
      %74 = vector.load %arg10[%c48, %c0_57] : memref<64x128xf32, #tpu.memory_space<vmem>>, vector<16x128xf32>
      tpu.vector_store %arg10[%c48, %c0_57], %73 {strides = array<i32>} : memref<64x128xf32, #tpu.memory_space<vmem>>, vector<16x128xf32>,
    } else {
    }
    %c7 = arith.constant 7 : index
    %c0_11 = arith.constant 0 : index
    %16 = vector.load %arg10[%c7, %c0_11] : memref<64x128xf32, #tpu.memory_space<vmem>>, vector<48x128xf32>
    %c8 = arith.constant 8 : index
    %c0_12 = arith.constant 0 : index
    %17 = vector.load %arg10[%c8, %c0_12] : memref<64x128xf32, #tpu.memory_space<vmem>>, vector<48x128xf32>
    %18 = tpu.concatenate %16, %17 in 1 : vector<48x128xf32>, vector<48x128xf32> -> vector<48x256xf32>
    %19 = arith.truncf %18 : vector<48x256xf32> to vector<48x256xbf16>
    %c0_13 = arith.constant 0 : index
    %c0_14 = arith.constant 0 : index
    %20 = vector.load %arg5[%c0_13, %c0_14] : memref<384x128xbf16, #tpu.memory_space<vmem>>, vector<256x128xbf16>
    %cst_15 = arith.constant dense<0.000000e+00> : vector<48x128xf32>
    %21 = tpu.matmul %19, %20, %cst_15 {dimension_numbers = #tpu.dot_dimension_numbers<[1], [0], [0], [1], [0, 0, 1, 1], [], []>} : vector<48x256xbf16>, vector<256x128xbf16>, vector<48x128xf32> -> vector<48x128xf32>
    %c9 = arith.constant 9 : index
    %c0_16 = arith.constant 0 : index
    %22 = vector.load %arg10[%c9, %c0_16] : memref<64x128xf32, #tpu.memory_space<vmem>>, vector<48x128xf32>
    %23 = arith.truncf %22 : vector<48x128xf32> to vector<48x128xbf16>
    %c256 = arith.constant 256 : index
    %c0_17 = arith.constant 0 : index
    %24 = vector.load %arg5[%c256, %c0_17] : memref<384x128xbf16, #tpu.memory_space<vmem>>, vector<128x128xbf16>
    %cst_18 = arith.constant dense<0.000000e+00> : vector<48x128xf32>
    %25 = tpu.matmul %23, %24, %cst_18 {dimension_numbers = #tpu.dot_dimension_numbers<[1], [0], [0], [1], [0, 0, 1, 1], [], []>} : vector<48x128xbf16>, vector<128x128xbf16>, vector<48x128xf32> -> vector<48x128xf32>
    %26 = arith.addf %21, %25 : vector<48x128xf32>
    %c0_19 = arith.constant 0 : index
    %c0_20 = arith.constant 0 : index
    %27 = vector.load %arg6[%c0_19, %c0_20] : memref<1x128xf32, #tpu.memory_space<vmem>>, vector<1x128xf32>
    %28 = vector.broadcast %27 : vector<1x128xf32> to vector<48x128xf32>
    %29 = arith.addf %26, %28 : vector<48x128xf32>
    %cst_21 = arith.constant 0.000000e+00 : f32
    %30 = vector.broadcast %cst_21 : f32 to vector<48x128xf32>
    %31 = arith.maximumf %29, %30 : vector<48x128xf32>
    %c0_22 = arith.constant 0 : index
    %c0_23 = arith.constant 0 : index
    %32 = vector.load %arg11[%c0_22, %c0_23] : memref<48x128xf32, #tpu.memory_space<vmem>>, vector<48x128xf32>
    tpu.vector_store %arg11[%c0_22, %c0_23], %31 {strides = array<i32>} : memref<48x128xf32, #tpu.memory_space<vmem>>, vector<48x128xf32>,
    %c0_i32_24 = arith.constant 0 : i32
    %33 = arith.cmpi eq, %arg1, %c0_i32_24 : i32
    %34 = arith.extui %33 : i1 to i32
    %c0_i32_25 = arith.constant 0 : i32
    %35 = arith.cmpi ne, %34, %c0_i32_25 : i32
    scf.if %35 {
      %cst_56 = arith.constant 0.000000e+00 : f32
      %73 = vector.broadcast %cst_56 : f32 to vector<8x128xf32>
      %c0_57 = arith.constant 0 : index
      %c0_58 = arith.constant 0 : index
      %74 = vector.load %arg11[%c0_57, %c0_58] : memref<48x128xf32, #tpu.memory_space<vmem>>, vector<8x128xf32>
      tpu.vector_store %arg11[%c0_57, %c0_58], %73 {strides = array<i32>} : memref<48x128xf32, #tpu.memory_space<vmem>>, vector<8x128xf32>,
    } else {
    }
    %c2_i32_26 = arith.constant 2 : i32
    %36 = arith.cmpi eq, %arg1, %c2_i32_26 : i32
    %37 = arith.extui %36 : i1 to i32
    %c0_i32_27 = arith.constant 0 : i32
    %38 = arith.cmpi ne, %37, %c0_i32_27 : i32
    scf.if %38 {
      %cst_56 = arith.constant 0.000000e+00 : f32
      %73 = vector.broadcast %cst_56 : f32 to vector<8x128xf32>
      %c40 = arith.constant 40 : index
      %c0_57 = arith.constant 0 : index
      %74 = vector.load %arg11[%c40, %c0_57] : memref<48x128xf32, #tpu.memory_space<vmem>>, vector<8x128xf32>
      tpu.vector_store %arg11[%c40, %c0_57], %73 {strides = array<i32>} : memref<48x128xf32, #tpu.memory_space<vmem>>, vector<8x128xf32>,
    } else {
    }
    %c6 = arith.constant 6 : index
    %c0_28 = arith.constant 0 : index
    %39 = vector.load %arg11[%c6, %c0_28] : memref<48x128xf32, #tpu.memory_space<vmem>>, vector<32x128xf32>
    %c7_29 = arith.constant 7 : index
    %c0_30 = arith.constant 0 : index
    %40 = vector.load %arg11[%c7_29, %c0_30] : memref<48x128xf32, #tpu.memory_space<vmem>>, vector<32x128xf32>
    %41 = tpu.concatenate %39, %40 in 1 : vector<32x128xf32>, vector<32x128xf32> -> vector<32x256xf32>
    %42 = arith.truncf %41 : vector<32x256xf32> to vector<32x256xbf16>
    %c0_31 = arith.constant 0 : index
    %c0_32 = arith.constant 0 : index
    %43 = vector.load %arg7[%c0_31, %c0_32] : memref<640x128xbf16, #tpu.memory_space<vmem>>, vector<256x128xbf16>
    %cst_33 = arith.constant dense<0.000000e+00> : vector<32x128xf32>
    %44 = tpu.matmul %42, %43, %cst_33 {dimension_numbers = #tpu.dot_dimension_numbers<[1], [0], [0], [1], [0, 0, 1, 1], [], []>} : vector<32x256xbf16>, vector<256x128xbf16>, vector<32x128xf32> -> vector<32x128xf32>
    %c8_34 = arith.constant 8 : index
    %c0_35 = arith.constant 0 : index
    %45 = vector.load %arg11[%c8_34, %c0_35] : memref<48x128xf32, #tpu.memory_space<vmem>>, vector<32x128xf32>
    %c9_36 = arith.constant 9 : index
    %c0_37 = arith.constant 0 : index
    %46 = vector.load %arg11[%c9_36, %c0_37] : memref<48x128xf32, #tpu.memory_space<vmem>>, vector<32x128xf32>
    %47 = tpu.concatenate %45, %46 in 1 : vector<32x128xf32>, vector<32x128xf32> -> vector<32x256xf32>
    %48 = arith.truncf %47 : vector<32x256xf32> to vector<32x256xbf16>
    %c256_38 = arith.constant 256 : index
    %c0_39 = arith.constant 0 : index
    %49 = vector.load %arg7[%c256_38, %c0_39] : memref<640x128xbf16, #tpu.memory_space<vmem>>, vector<256x128xbf16>
    %cst_40 = arith.constant dense<0.000000e+00> : vector<32x128xf32>
    %50 = tpu.matmul %48, %49, %cst_40 {dimension_numbers = #tpu.dot_dimension_numbers<[1], [0], [0], [1], [0, 0, 1, 1], [], []>} : vector<32x256xbf16>, vector<256x128xbf16>, vector<32x128xf32> -> vector<32x128xf32>
    %51 = arith.addf %44, %50 : vector<32x128xf32>
    %c10 = arith.constant 10 : index
    %c0_41 = arith.constant 0 : index
    %52 = vector.load %arg11[%c10, %c0_41] : memref<48x128xf32, #tpu.memory_space<vmem>>, vector<32x128xf32>
    %53 = arith.truncf %52 : vector<32x128xf32> to vector<32x128xbf16>
    %c512 = arith.constant 512 : index
    %c0_42 = arith.constant 0 : index
    %54 = vector.load %arg7[%c512, %c0_42] : memref<640x128xbf16, #tpu.memory_space<vmem>>, vector<128x128xbf16>
    %cst_43 = arith.constant dense<0.000000e+00> : vector<32x128xf32>
    %55 = tpu.matmul %53, %54, %cst_43 {dimension_numbers = #tpu.dot_dimension_numbers<[1], [0], [0], [1], [0, 0, 1, 1], [], []>} : vector<32x128xbf16>, vector<128x128xbf16>, vector<32x128xf32> -> vector<32x128xf32>
    %56 = arith.addf %51, %55 : vector<32x128xf32>
    %c0_44 = arith.constant 0 : index
    %c0_45 = arith.constant 0 : index
    %57 = vector.load %arg8[%c0_44, %c0_45] : memref<1x128xf32, #tpu.memory_space<vmem>>, vector<1x128xf32>
    %58 = vector.broadcast %57 : vector<1x128xf32> to vector<32x128xf32>
    %59 = arith.addf %56, %58 : vector<32x128xf32>
    %cst_46 = arith.constant 0.000000e+00 : f32
    %60 = vector.broadcast %cst_46 : f32 to vector<32x128xf32>
    %61 = arith.maximumf %59, %60 : vector<32x128xf32>
    %c0_i32_47 = arith.constant 0 : i32
    %62 = arith.cmpi eq, %arg1, %c0_i32_47 : i32
    %63 = arith.extui %62 : i1 to i32
    %c0_i32_48 = arith.constant 0 : i32
    %64 = arith.cmpi ne, %63, %c0_i32_48 : i32
    scf.if %64 {
      %cst_56 = arith.constant 0.000000e+00 : f32
      %73 = vector.broadcast %cst_56 : f32 to vector<1x128xf32>
      %c0_57 = arith.constant 0 : index
      %c0_58 = arith.constant 0 : index
      %74 = vector.load %arg12[%c0_57, %c0_58] : memref<1x128xf32, #tpu.memory_space<vmem>>, vector<1x128xf32>
      tpu.vector_store %arg12[%c0_57, %c0_58], %73 {strides = array<i32>} : memref<1x128xf32, #tpu.memory_space<vmem>>, vector<1x128xf32>,
    } else {
    }
    %c0_49 = arith.constant 0 : index
    %c0_50 = arith.constant 0 : index
    %65 = vector.load %arg12[%c0_49, %c0_50] : memref<1x128xf32, #tpu.memory_space<vmem>>, vector<1x128xf32>
    %cst_51 = arith.constant dense<0.000000e+00> : vector<128xf32>
    %66 = vector.multi_reduction <add>, %61, %cst_51 [0] : vector<32x128xf32> to vector<128xf32>
    %67 = vector.shape_cast %66 : vector<128xf32> to vector<1x128xf32>
    %68 = arith.addf %65, %67 : vector<1x128xf32>
    %c0_52 = arith.constant 0 : index
    %c0_53 = arith.constant 0 : index
    %69 = vector.load %arg12[%c0_52, %c0_53] : memref<1x128xf32, #tpu.memory_space<vmem>>, vector<1x128xf32>
    tpu.vector_store %arg12[%c0_52, %c0_53], %68 {strides = array<i32>} : memref<1x128xf32, #tpu.memory_space<vmem>>, vector<1x128xf32>,
    %c2_i32_54 = arith.constant 2 : i32
    %70 = arith.cmpi eq, %arg1, %c2_i32_54 : i32
    %71 = arith.extui %70 : i1 to i32
    %c0_i32_55 = arith.constant 0 : i32
    %72 = arith.cmpi ne, %71, %c0_i32_55 : i32
    scf.if %72 {
      %c0_56 = arith.constant 0 : index
      %c0_57 = arith.constant 0 : index
      %73 = vector.load %arg12[%c0_56, %c0_57] : memref<1x128xf32, #tpu.memory_space<vmem>>, vector<1x128xf32>
      %cst_58 = arith.constant 0.010416667 : f32
      %74 = vector.broadcast %cst_58 : f32 to vector<1x128xf32>
      %75 = arith.mulf %73, %74 : vector<1x128xf32>
      %c0_59 = arith.constant 0 : index
      %c0_60 = arith.constant 0 : index
      %c0_61 = arith.constant 0 : index
      %76 = vector.load %arg9[%c0_59, %c0_60, %c0_61] : memref<1x1x128xf32, #tpu.memory_space<vmem>>, vector<1x1x128xf32>
      %77 = vector.shape_cast %76 : vector<1x1x128xf32> to vector<1x128xf32>
      %78 = vector.shape_cast %75 : vector<1x128xf32> to vector<1x1x128xf32>
      tpu.vector_store %arg9[%c0_59, %c0_60, %c0_61], %78 {strides = array<i32>} : memref<1x1x128xf32, #tpu.memory_space<vmem>>, vector<1x1x128xf32>,
    } else {
    }
    return
  }
  func.func @transform_0(%arg0: i32, %arg1: i32) -> (i32, i32, i32, i32) {
    %c0_i32 = arith.constant 0 : i32
    %c0_i32_0 = arith.constant 0 : i32
    %c0_i32_1 = arith.constant 0 : i32
    return %arg0, %arg1, %c0_i32, %c0_i32_0 : i32, i32, i32, i32
  }
  func.func @transform_1(%arg0: i32, %arg1: i32) -> (i32, i32) {
    %c0_i32 = arith.constant 0 : i32
    %c0_i32_0 = arith.constant 0 : i32
    %c0_i32_1 = arith.constant 0 : i32
    return %c0_i32, %c0_i32_0 : i32, i32
  }
  func.func @transform_2(%arg0: i32, %arg1: i32) -> (i32, i32) {
    %c0_i32 = arith.constant 0 : i32
    %c0_i32_0 = arith.constant 0 : i32
    %c0_i32_1 = arith.constant 0 : i32
    return %c0_i32, %c0_i32_0 : i32, i32
  }
  func.func @transform_3(%arg0: i32, %arg1: i32) -> (i32, i32) {
    %c0_i32 = arith.constant 0 : i32
    %c0_i32_0 = arith.constant 0 : i32
    %c0_i32_1 = arith.constant 0 : i32
    return %c0_i32, %c0_i32_0 : i32, i32
  }
  func.func @transform_4(%arg0: i32, %arg1: i32) -> (i32, i32) {
    %c0_i32 = arith.constant 0 : i32
    %c0_i32_0 = arith.constant 0 : i32
    %c0_i32_1 = arith.constant 0 : i32
    return %c0_i32, %c0_i32_0 : i32, i32
  }
  func.func @transform_5(%arg0: i32, %arg1: i32) -> (i32, i32) {
    %c0_i32 = arith.constant 0 : i32
    %c0_i32_0 = arith.constant 0 : i32
    %c0_i32_1 = arith.constant 0 : i32
    return %c0_i32, %c0_i32_0 : i32, i32
  }
  func.func @transform_6(%arg0: i32, %arg1: i32) -> (i32, i32) {
    %c0_i32 = arith.constant 0 : i32
    %c0_i32_0 = arith.constant 0 : i32
    %c0_i32_1 = arith.constant 0 : i32
    return %c0_i32, %c0_i32_0 : i32, i32
  }
  func.func @transform_7(%arg0: i32, %arg1: i32) -> (i32, i32, i32) {
    %c0_i32 = arith.constant 0 : i32
    %c0_i32_0 = arith.constant 0 : i32
    %c0_i32_1 = arith.constant 0 : i32
    return %arg0, %c0_i32, %c0_i32_0 : i32, i32, i32
  }
}

</mosaic_0001>

<llo_original>
// kernel: tpu_custom_call.1
$region0: #{tpu_custom_call.1}
  #allocation0 [shape = 'u32[]', space=smem, size = 0x4, offset = 0x4, fixed_abs, tag = 'smem constant byte address 0x4 - core index']
  #allocation1 [shape = 'u32[72,128]{1,0:T(1,128)}', space=vmem, size = 0x9000, scoped, tag = 'internal scratch']
  #allocation2 [shape = 'f32[64,128]{1,0:T(8,128)}', space=vmem, size = 0x8000, scoped, tag = 'scratch operand']
  #allocation3 [shape = 'f32[48,128]{1,0:T(8,128)}', space=vmem, size = 0x6000, scoped, tag = 'scratch operand']
  #allocation4 [shape = 'f32[1,128]{1,0:T(1,128)}', space=vmem, size = 0x200, scoped, tag = 'scratch operand']
  %s0 = inlined_call_operand.vmem [shape: s8[2,3,64,8], index: 0, kind: input, shape index: {}]
  %s1 = inlined_call_operand.vmem [shape: f32[8,128], index: 1, kind: input, shape index: {}]
  %s2 = inlined_call_operand.vmem [shape: f32[1,128], index: 2, kind: input, shape index: {}]
  %s3 = inlined_call_operand.hbm [shape: bf16[384,128], index: 3, kind: input, shape index: {}]
  %s4 = inlined_call_operand.vmem [shape: f32[1,128], index: 4, kind: input, shape index: {}]
  %s5 = inlined_call_operand.hbm [shape: bf16[640,128], index: 5, kind: input, shape index: {}]
  %s6 = inlined_call_operand.vmem [shape: f32[1,128], index: 6, kind: input, shape index: {}]
  %s7 = inlined_call_operand.hbm [shape: f32[2,1,128], index: 7, kind: output, shape index: {}]
  %s8 = sld [smem:[#allocation0]]
  $region93: #{tpu_custom_call.1} parent=0
    _
  %s10 = ssub.s32 1, %s8
  %s11 = scalar_select 0, %s10, %s8
  $region1: #{tpu_custom_call.1} parent=0
    #allocation5 [shape = 'u8[98304]{0}', space=vmem, size = 0x18000, scoped, tag = 'input window, operand 3, single buffered']
    #allocation6 [shape = 's32[2]{0}', space=sflag, size = 0x8, scoped, tag = 'scoped memory for tpu_custom_call.1']
    #allocation7 [shape = 's32[2]{0}', space=sflag, size = 0x8, scoped, tag = 'scoped memory for tpu_custom_call.1']
    #allocation8 [shape = 'u8[163840]{0}', space=vmem, size = 0x28000, scoped, tag = 'input window, operand 5, single buffered']
    #allocation9 [shape = 's32[1]{0}', space=sflag, size = 0x4, scoped, tag = 'scoped memory for tpu_custom_call.1']
    #allocation10 [shape = 'u8[1024]{0}', space=vmem, size = 0x400, scoped, tag = 'output window, operand 0']
    %12 = vsyncpa [#allocation6], 0
    %13 = vsyncpa [#allocation9], 0
    %14 = vsyncpa [#allocation7], 0
    %s15 = scalar_lea.sflag [#allocation7], 1
    %16 = vsyncpa %s15, 0
    loop: start=0, step=1, limit=8
    $region2: #{tpu_custom_call.1} parent=1 // loop_pre_header
      _
    $region3: #{tpu_custom_call.1} parent=1 // loop_header
      %s18 = sphi 0, %s22
      %p19 = scmp.ge.s32.totalorder %s18, 8
      %s25 = sphi 0, %s37
      %s26 = sphi 0, %s33
      %s27 = sphi 0, %s25
      %s28 = sphi 0, %s26
      %s29 = sphi 0, %s27
      %s30 = sphi 0, %s28
      %s42 = sphi 0, %s44
      %s45 = sphi 0, %s42
      %s46 = sphi 0, %s45
      %s62 = sphi 0, %s46
      %s66 = sphi 0, %s66
      %s68 = sphi 0, %s66
      %s69 = sphi 0, %s68
      %s83 = sphi 0, %s69
      %s87 = sphi 0, %s87
      %s89 = sphi 0, %s87
      %s90 = sphi 0, %s89
      %s104 = sphi 0, %s90
      %s108 = sphi 0, %s108
      %s110 = sphi 0, %s108
      %s111 = sphi 0, %s110
      %s125 = sphi 0, %s111
      %s129 = sphi 0, %s129
      %s131 = sphi 0, %s129
      %s132 = sphi 0, %s131
      %s146 = sphi 0, %s132
      %s150 = sphi 0, %s150
      %s152 = sphi 0, %s150
      %s153 = sphi 0, %s152
      %s167 = sphi 0, %s153
      %s171 = sphi 0, %s171
      %s173 = sphi 0, %s171
      %s174 = sphi 0, %s173
      %s188 = sphi 0, %s174
      %s194 = sphi 0, %s196
      %s197 = sphi 0, %s194
      %s198 = sphi 0, %s197
      %s214 = sphi 0, %s198
    $region4: #{tpu_custom_call.1} parent=1 // loop_header_branch
      %21 = sbr.rel (%p19) target = $region8
    $region5: #{tpu_custom_call.1} parent=1 // loop_body
      %s23 = ssub.s32 %s18, 1
      %s24 = ssub.s32 %s18, 2
      %s31 = sadd.s32 1, %s26
      %p32 = scmp.ge.s32.totalorder %s31, 3
      %s33 = scalar_select %p32, 0, %s31
      %s34 = sadd.s32 1, %s25
      %s35 = scalar_select %p32, %s34, %s25
      %p36 = scmp.ge.s32.totalorder %s35, 2
      %s37 = scalar_select %p36, 0, %s35
      %s38 = ssub.s32 %s25, %s37
      %s39 = ssub.s32 %s26, %s33
      %s40 = sor.u32 %s38, %s39
      %p41 = scmp.eq.s32.totalorder %s40, 0
      %s43 = sadd.s32 %s42, 1
      %s44 = scalar_select %p41, %s42, %s43
      %p47 = pneg %p41
      %p48 = scmp.eq.s32.totalorder %s18, 5
      %p49 = por %p47, %p48
      %p50 = scmp.ne.s32.totalorder %s42, %s45
      %p51 = scmp.eq.s32.totalorder %s18, 0
      %p52 = por %p50, %p51
      %p53 = scmp.ne.s32.totalorder %s42, %s45
      %p54 = scmp.eq.s32.totalorder %s23, 5
      %p55 = por %p53, %p54
      %p56 = scmp.ne.s32.totalorder %s45, %s46
      %p57 = scmp.eq.s32.totalorder %s23, 0
      %p58 = por %p56, %p57
      %p59 = scmp.ne.s32.totalorder %s45, %s46
      %p60 = scmp.eq.s32.totalorder %s24, 5
      %p61 = por %p59, %p60
      %p63 = scmp.ne.s32.totalorder %s46, %s62
      %p64 = scmp.eq.s32.totalorder %s24, 0
      %p65 = por %p63, %p64
      %s67 = sadd.s32 %s66, 1
      %p70 = scmp.eq.s32.totalorder %s18, 5
      %p71 = scmp.ne.s32.totalorder %s66, %s68
      %p72 = scmp.eq.s32.totalorder %s18, 0
      %p73 = por %p71, %p72
      %p74 = scmp.ne.s32.totalorder %s66, %s68
      %p75 = scmp.eq.s32.totalorder %s23, 5
      %p76 = por %p74, %p75
      %p77 = scmp.ne.s32.totalorder %s68, %s69
      %p78 = scmp.eq.s32.totalorder %s23, 0
      %p79 = por %p77, %p78
      %p80 = scmp.ne.s32.totalorder %s68, %s69
      %p81 = scmp.eq.s32.totalorder %s24, 5
      %p82 = por %p80, %p81
      %p84 = scmp.ne.s32.totalorder %s69, %s83
      %p85 = scmp.eq.s32.totalorder %s24, 0
      %p86 = por %p84, %p85
      %s88 = sadd.s32 %s87, 1
      %p91 = scmp.eq.s32.totalorder %s18, 5
      %p92 = scmp.ne.s32.totalorder %s87, %s89
      %p93 = scmp.eq.s32.totalorder %s18, 0
      %p94 = por %p92, %p93
      %p95 = scmp.ne.s32.totalorder %s87, %s89
      %p96 = scmp.eq.s32.totalorder %s23, 5
      %p97 = por %p95, %p96
      %p98 = scmp.ne.s32.totalorder %s89, %s90
      %p99 = scmp.eq.s32.totalorder %s23, 0
      %p100 = por %p98, %p99
      %p101 = scmp.ne.s32.totalorder %s89, %s90
      %p102 = scmp.eq.s32.totalorder %s24, 5
      %p103 = por %p101, %p102
      %p105 = scmp.ne.s32.totalorder %s90, %s104
      %p106 = scmp.eq.s32.totalorder %s24, 0
      %p107 = por %p105, %p106
      %s109 = sadd.s32 %s108, 1
      %p112 = scmp.eq.s32.totalorder %s18, 5
      %p113 = scmp.ne.s32.totalorder %s108, %s110
      %p114 = scmp.eq.s32.totalorder %s18, 0
      %p115 = por %p113, %p114
      %p116 = scmp.ne.s32.totalorder %s108, %s110
      %p117 = scmp.eq.s32.totalorder %s23, 5
      %p118 = por %p116, %p117
      %p119 = scmp.ne.s32.totalorder %s110, %s111
      %p120 = scmp.eq.s32.totalorder %s23, 0
      %p121 = por %p119, %p120
      %p122 = scmp.ne.s32.totalorder %s110, %s111
      %p123 = scmp.eq.s32.totalorder %s24, 5
      %p124 = por %p122, %p123
      %p126 = scmp.ne.s32.totalorder %s111, %s125
      %p127 = scmp.eq.s32.totalorder %s24, 0
      %p128 = por %p126, %p127
      %s130 = sadd.s32 %s129, 1
      %p133 = scmp.eq.s32.totalorder %s18, 5
      %p134 = scmp.ne.s32.totalorder %s129, %s131
      %p135 = scmp.eq.s32.totalorder %s18, 0
      %p136 = por %p134, %p135
      %p137 = scmp.ne.s32.totalorder %s129, %s131
      %p138 = scmp.eq.s32.totalorder %s23, 5
      %p139 = por %p137, %p138
      %p140 = scmp.ne.s32.totalorder %s131, %s132
      %p141 = scmp.eq.s32.totalorder %s23, 0
      %p142 = por %p140, %p141
      %p143 = scmp.ne.s32.totalorder %s131, %s132
      %p144 = scmp.eq.s32.totalorder %s24, 5
      %p145 = por %p143, %p144
      %p147 = scmp.ne.s32.totalorder %s132, %s146
      %p148 = scmp.eq.s32.totalorder %s24, 0
      %p149 = por %p147, %p148
      %s151 = sadd.s32 %s150, 1
      %p154 = scmp.eq.s32.totalorder %s18, 5
      %p155 = scmp.ne.s32.totalorder %s150, %s152
      %p156 = scmp.eq.s32.totalorder %s18, 0
      %p157 = por %p155, %p156
      %p158 = scmp.ne.s32.totalorder %s150, %s152
      %p159 = scmp.eq.s32.totalorder %s23, 5
      %p160 = por %p158, %p159
      %p161 = scmp.ne.s32.totalorder %s152, %s153
      %p162 = scmp.eq.s32.totalorder %s23, 0
      %p163 = por %p161, %p162
      %p164 = scmp.ne.s32.totalorder %s152, %s153
      %p165 = scmp.eq.s32.totalorder %s24, 5
      %p166 = por %p164, %p165
      %p168 = scmp.ne.s32.totalorder %s153, %s167
      %p169 = scmp.eq.s32.totalorder %s24, 0
      %p170 = por %p168, %p169
      %s172 = sadd.s32 %s171, 1
      %p175 = scmp.eq.s32.totalorder %s18, 5
      %p176 = scmp.ne.s32.totalorder %s171, %s173
      %p177 = scmp.eq.s32.totalorder %s18, 0
      %p178 = por %p176, %p177
      %p179 = scmp.ne.s32.totalorder %s171, %s173
      %p180 = scmp.eq.s32.totalorder %s23, 5
      %p181 = por %p179, %p180
      %p182 = scmp.ne.s32.totalorder %s173, %s174
      %p183 = scmp.eq.s32.totalorder %s23, 0
      %p184 = por %p182, %p183
      %p185 = scmp.ne.s32.totalorder %s173, %s174
      %p186 = scmp.eq.s32.totalorder %s24, 5
      %p187 = por %p185, %p186
      %p189 = scmp.ne.s32.totalorder %s174, %s188
      %p190 = scmp.eq.s32.totalorder %s24, 0
      %p191 = por %p189, %p190
      %s192 = ssub.s32 %s25, %s37
      %p193 = scmp.eq.s32.totalorder %s192, 0
      %s195 = sadd.s32 %s194, 1
      %s196 = scalar_select %p193, %s194, %s195
      %p199 = pneg %p193
      %p200 = scmp.eq.s32.totalorder %s18, 5
      %p201 = por %p199, %p200
      %p202 = scmp.ne.s32.totalorder %s194, %s197
      %p203 = scmp.eq.s32.totalorder %s18, 0
      %p204 = por %p202, %p203
      %p205 = scmp.ne.s32.totalorder %s194, %s197
      %p206 = scmp.eq.s32.totalorder %s23, 5
      %p207 = por %p205, %p206
      %p208 = scmp.ne.s32.totalorder %s197, %s198
      %p209 = scmp.eq.s32.totalorder %s23, 0
      %p210 = por %p208, %p209
      %p211 = scmp.ne.s32.totalorder %s197, %s198
      %p212 = scmp.eq.s32.totalorder %s24, 5
      %p213 = por %p211, %p212
      %p215 = scmp.ne.s32.totalorder %s198, %s214
      %p216 = scmp.eq.s32.totalorder %s24, 0
      %p217 = por %p215, %p216
      %p218 = scmp.le.s32.totalorder 1, %s18
      %p219 = scmp.lt.s32.totalorder %s18, 7
      %p220 = pnand %p218, %p219
      %p221 = pneg %p220
      // Predicated region
      $region9: #{tpu_custom_call.1} parent=5 // pred_check
        _
      $region10: #{tpu_custom_call.1} parent=5 // pred_check_branch
        %223 = sbr.rel (%p220) target = $region12
      $region11: #{tpu_custom_call.1} parent=5 // pred_region
        %s224 = ssub.s32 %s18, 1
        // Predicated region
        $region13: #{tpu_custom_call.1} parent=11 // pred_check
          %p225 = pneg %p79
        $region14: #{tpu_custom_call.1} parent=11 // pred_check_branch
          %227 = sbr.rel (%p225) target = $region16
        $region15: #{tpu_custom_call.1} parent=11 // pred_region
          _
        $region16: #{tpu_custom_call.1} parent=11 // pred_fallthru
          _
        // Predicated region
        $region17: #{tpu_custom_call.1} parent=11 // pred_check
          %p228 = pneg %p100
        $region18: #{tpu_custom_call.1} parent=11 // pred_check_branch
          %230 = sbr.rel (%p228) target = $region20
        $region19: #{tpu_custom_call.1} parent=11 // pred_region
          _
        $region20: #{tpu_custom_call.1} parent=11 // pred_fallthru
          _
        // Predicated region
        $region21: #{tpu_custom_call.1} parent=11 // pred_check
          %p231 = pneg %p121
        $region22: #{tpu_custom_call.1} parent=11 // pred_check_branch
          %233 = sbr.rel (%p231) target = $region24
        $region23: #{tpu_custom_call.1} parent=11 // pred_region
          %235 = vsyncadd [#allocation6], 0
          %s236 = sshll.u32 %s3, 4
          %s237 = int_to_ptr.hbm [resolvable:$true] %s236
          %s238 = sshll.u32 [#allocation5], 4
          %s239 = int_to_ptr.vmem [resolvable:$true] %s238
          %244 = dma.hbm_to_vmem [thread:$0]  %s237, 3072, %s239, [#allocation6], 64, 64, 4
        $region24: #{tpu_custom_call.1} parent=11 // pred_fallthru
          _
        // Predicated region
        $region25: #{tpu_custom_call.1} parent=11 // pred_check
          %p245 = pneg %p142
        $region26: #{tpu_custom_call.1} parent=11 // pred_check_branch
          %247 = sbr.rel (%p245) target = $region28
        $region27: #{tpu_custom_call.1} parent=11 // pred_region
          _
        $region28: #{tpu_custom_call.1} parent=11 // pred_fallthru
          _
        // Predicated region
        $region29: #{tpu_custom_call.1} parent=11 // pred_check
          %p248 = pneg %p163
        $region30: #{tpu_custom_call.1} parent=11 // pred_check_branch
          %250 = sbr.rel (%p248) target = $region32
        $region31: #{tpu_custom_call.1} parent=11 // pred_region
          %252 = vsyncadd [#allocation9], 0
          %s253 = sshll.u32 %s5, 4
          %s254 = int_to_ptr.hbm [resolvable:$true] %s253
          %s255 = sshll.u32 [#allocation8], 4
          %s256 = int_to_ptr.vmem [resolvable:$true] %s255
          %261 = dma.hbm_to_vmem [thread:$0]  %s254, 5120, %s256, [#allocation9], 64, 64, 4
        $region32: #{tpu_custom_call.1} parent=11 // pred_fallthru
          _
        // Predicated region
        $region33: #{tpu_custom_call.1} parent=11 // pred_check
          %p262 = pneg %p184
        $region34: #{tpu_custom_call.1} parent=11 // pred_check_branch
          %264 = sbr.rel (%p262) target = $region36
        $region35: #{tpu_custom_call.1} parent=11 // pred_region
          _
        $region36: #{tpu_custom_call.1} parent=11 // pred_fallthru
          _
      $region12: #{tpu_custom_call.1} parent=5 // pred_fallthru
        _
      %p265 = scmp.lt.s32.totalorder %s18, 6
      // Predicated region
      $region37: #{tpu_custom_call.1} parent=5 // pred_check
        %p266 = pneg %p265
      $region38: #{tpu_custom_call.1} parent=5 // pred_check_branch
        %268 = sbr.rel (%p266) target = $region40
      $region39: #{tpu_custom_call.1} parent=5 // pred_region
        // Predicated region
        $region41: #{tpu_custom_call.1} parent=39 // pred_check
          %p269 = pneg %p52
        $region42: #{tpu_custom_call.1} parent=39 // pred_check_branch
          %271 = sbr.rel (%p269) target = $region44
        $region43: #{tpu_custom_call.1} parent=39 // pred_region
          %p272 = scmp.lt.s32.totalorder %s25, 1
          %s273 = scalar_select %p272, %s25, 1
          %p274 = scmp.lt.s32.totalorder %s26, 2
          %s275 = scalar_select %p274, %s26, 2
          %s276 = smul.addr %s275, 8
          %s277 = smul.addr %s273, 24
          %s278 = sadd.s32 %s276, %s277
          %s279 = smul.addr %s278, 2
          %s280 = scalar_lea.vmem %s0, %s279
        $region44: #{tpu_custom_call.1} parent=39 // pred_fallthru
          _
      $region40: #{tpu_custom_call.1} parent=5 // pred_fallthru
        _
      %p281 = scmp.le.s32.totalorder 1, %s18
      %p282 = scmp.lt.s32.totalorder %s18, 7
      %p283 = pnand %p281, %p282
      %p284 = pneg %p283
      // Predicated region
      $region45: #{tpu_custom_call.1} parent=5 // pred_check
        _
      $region46: #{tpu_custom_call.1} parent=5 // pred_check_branch
        %286 = sbr.rel (%p283) target = $region48
      $region47: #{tpu_custom_call.1} parent=5 // pred_region
        %s287 = ssub.s32 %s18, 1
        // Predicated region
        $region49: #{tpu_custom_call.1} parent=47 // pred_check
          %p288 = pneg %p121
        $region50: #{tpu_custom_call.1} parent=47 // pred_check_branch
          %290 = sbr.rel (%p288) target = $region52
        $region51: #{tpu_custom_call.1} parent=47 // pred_region
          %292 = dma.done [#allocation6], 3072
        $region52: #{tpu_custom_call.1} parent=47 // pred_fallthru
          _
        // Predicated region
        $region53: #{tpu_custom_call.1} parent=47 // pred_check
          %p293 = pneg %p163
        $region54: #{tpu_custom_call.1} parent=47 // pred_check_branch
          %295 = sbr.rel (%p293) target = $region56
        $region55: #{tpu_custom_call.1} parent=47 // pred_region
          %297 = dma.done [#allocation9], 5120
        $region56: #{tpu_custom_call.1} parent=47 // pred_fallthru
          _
        %p298 = scmp.lt.s32.totalorder %s27, 1
        %s299 = scalar_select %p298, %s27, 1
        %p300 = scmp.lt.s32.totalorder %s28, 2
        %s301 = scalar_select %p300, %s28, 2
        %s302 = smul.addr %s301, 8
        %s303 = smul.addr %s299, 24
        %s304 = sadd.s32 %s302, %s303
        %s305 = smul.addr %s304, 2
        %s306 = scalar_lea.vmem %s0, %s305
        %p307 = pneg %p58
        %p308 = pneg %p55
        %p309 = pneg %p79
        %p310 = pneg %p76
        %p311 = pneg %p100
        %p312 = pneg %p97
        %p313 = pneg %p121
        %p314 = pneg %p118
        %p315 = pneg %p142
        %p316 = pneg %p139
        %p317 = pneg %p163
        %p318 = pneg %p160
        %p319 = pneg %p184
        %p320 = pneg %p181
        %p321 = pneg %p210
        %p322 = pneg %p207
        %s323 = sand.u32 %s197, 1
        %s324 = scalar_lea.sflag [#allocation7], %s323
        %s325 = sand.u32 %s197, 1
        %s326 = scalar_lea.vmem [#allocation10], %s325
        %p327 = scmp.lt.s32.totalorder %s27, 1
        %s328 = scalar_select %p327, %s27, 1
        %p329 = scmp.lt.s32.totalorder %s28, 2
        %s330 = scalar_select %p329, %s28, 2
        %s331 = smul.addr %s330, 8
        %s332 = smul.addr %s328, 24
        %s333 = sadd.s32 %s331, %s332
        %s334 = smul.addr %s333, 2
        %s335 = scalar_lea.vmem %s0, %s334
        %v336 = vld [vmem:[%s335] sm:$0x3]
        %v337 = vld [vmem:[%s335 + $0x2] sm:$0x3]
        %v338 = vld [vmem:[%s335 + $0x4] sm:$0x3]
        %v339 = vld [vmem:[%s335 + $0x6] sm:$0x3]
        %v340 = vld [vmem:[%s335 + $0x8] sm:$0x3]
        %v341 = vld [vmem:[%s335 + $0xa] sm:$0x3]
        %v342 = vld [vmem:[%s335 + $0xc] sm:$0x3]
        %v343 = vld [vmem:[%s335 + $0xe] sm:$0x3]
        %v344 = vunpack.c.0.s8 %v336
        %v345 = vunpack.c.0.s8 %v337
        %v346 = vunpack.c.0.s8 %v338
        %v347 = vunpack.c.0.s8 %v339
        %v348 = vunpack.c.0.s8 %v340
        %v349 = vunpack.c.0.s8 %v341
        %v350 = vunpack.c.0.s8 %v342
        %v351 = vunpack.c.0.s8 %v343
        %v352 = vcvt.s32.f32 %v344
        %v353 = vcvt.s32.f32 %v345
        %v354 = vcvt.s32.f32 %v346
        %v355 = vcvt.s32.f32 %v347
        %v356 = vcvt.s32.f32 %v348
        %v357 = vcvt.s32.f32 %v349
        %v358 = vcvt.s32.f32 %v350
        %v359 = vcvt.s32.f32 %v351
        %v360 = vld [vmem:[%s1] sm:$0xff]
        %v361 = vld [vmem:[%s2] sm:$0x1]
        %v363 = vperm.slane %v361, 0
        %vm365 = vcmask 64512
        %v367 = vsel %vm365, %v352, 0
        %v370 = vsel %vm365, %v353, 0
        %v373 = vsel %vm365, %v354, 0
        %v376 = vsel %vm365, %v355, 0
        %v379 = vsel %vm365, %v356, 0
        %v382 = vsel %vm365, %v357, 0
        %v385 = vsel %vm365, %v358, 0
        %v388 = vsel %vm365, %v359, 0
        %390 = vmatpush.msra.mxu0 0.0
        %391 = vmatpush.msra.mxu0 0.0
        %392 = vmatpush.msra.mxu0 0.0
        %393 = vmatpush.msra.mxu0 0.0
        %394 = vmatpush.msra.mxu0 0.0
        %395 = vmatpush.msra.mxu0 0.0
        %396 = vmatpush.msra.mxu0 0.0
        %397 = vmatpush.msra.mxu0 0.0
        %398 = vmatpush.msra.mxu0 0.0
        %399 = vmatpush.msra.mxu0 0.0
        %400 = vmatpush.msra.mxu0 0.0
        %401 = vmatpush.msra.mxu0 0.0
        %402 = vmatpush.msra.mxu0 0.0
        %403 = vmatpush.msra.mxu0 0.0
        %404 = vmatpush.msra.mxu0 0.0
        %405 = vmatpush.msra.mxu0 %v360
        %406 = vmatmul.f32.gmra.mxu0 %v367
        %v407 = vpop.f32.mrf.mxu0
        %v408 = vadd.f32 %v363, %v407
        %409 = vmatmul.f32.gmra.mxu0 %v370
        %v410 = vpop.f32.mrf.mxu0
        %v411 = vadd.f32 %v363, %v410
        %412 = vmatmul.f32.gmra.mxu0 %v373
        %v413 = vpop.f32.mrf.mxu0
        %v414 = vadd.f32 %v363, %v413
        %415 = vmatmul.f32.gmra.mxu0 %v376
        %v416 = vpop.f32.mrf.mxu0
        %v417 = vadd.f32 %v363, %v416
        %418 = vmatmul.f32.gmra.mxu0 %v379
        %v419 = vpop.f32.mrf.mxu0
        %v420 = vadd.f32 %v363, %v419
        %421 = vmatmul.f32.gmra.mxu0 %v382
        %v422 = vpop.f32.mrf.mxu0
        %v423 = vadd.f32 %v363, %v422
        %424 = vmatmul.f32.gmra.mxu0 %v385
        %v425 = vpop.f32.mrf.mxu0
        %v426 = vadd.f32 %v363, %v425
        %427 = vmatmul.f32.gmra.mxu0 %v388
        %v428 = vpop.f32.mrf.mxu0
        %v429 = vadd.f32 %v363, %v428
        %430 = vdwg.mxu0
        %431 = vst [vmem:[#allocation2] sm:$0xff] %v408
        %432 = vst [vmem:[#allocation2 + $0x8] sm:$0xff] %v411
        %433 = vst [vmem:[#allocation2 + $0x10] sm:$0xff] %v414
        %434 = vst [vmem:[#allocation2 + $0x18] sm:$0xff] %v417
        %435 = vst [vmem:[#allocation2 + $0x20] sm:$0xff] %v420
        %436 = vst [vmem:[#allocation2 + $0x28] sm:$0xff] %v423
        %437 = vst [vmem:[#allocation2 + $0x30] sm:$0xff] %v426
        %438 = vst [vmem:[#allocation2 + $0x38] sm:$0xff] %v429
        %p439 = scmp.eq.s32.totalorder %s28, 0
        // Predicated region
        $region57: #{tpu_custom_call.1} parent=47 // pred_check
          %p440 = pneg %p439
        $region58: #{tpu_custom_call.1} parent=47 // pred_check_branch
          %442 = sbr.rel (%p440) target = $region60
        $region59: #{tpu_custom_call.1} parent=47 // pred_region
          %443 = vst [vmem:[#allocation2] sm:$0xff] 0.0
          %444 = vst [vmem:[#allocation2 + $0x8] sm:$0xff] 0.0
        $region60: #{tpu_custom_call.1} parent=47 // pred_fallthru
          _
        %p445 = scmp.eq.s32.totalorder %s28, 2
        // Predicated region
        $region61: #{tpu_custom_call.1} parent=47 // pred_check
          %p446 = pneg %p445
        $region62: #{tpu_custom_call.1} parent=47 // pred_check_branch
          %448 = sbr.rel (%p446) target = $region64
        $region63: #{tpu_custom_call.1} parent=47 // pred_region
          %449 = vst [vmem:[#allocation2 + $0x30] sm:$0xff] 0.0
          %450 = vst [vmem:[#allocation2 + $0x38] sm:$0xff] 0.0
        $region64: #{tpu_custom_call.1} parent=47 // pred_fallthru
          _
        %v451 = vld [vmem:[#allocation2 + $0x7] sm:$0xff]
        %v452 = vld [vmem:[#allocation2 + $0xf] sm:$0xff]
        %v453 = vld [vmem:[#allocation2 + $0x17] sm:$0xff]
        %v454 = vld [vmem:[#allocation2 + $0x1f] sm:$0xff]
        %v455 = vld [vmem:[#allocation2 + $0x27] sm:$0xff]
        %v456 = vld [vmem:[#allocation2 + $0x2f] sm:$0xff]
        %v457 = vld [vmem:[#allocation2 + $0x8] sm:$0xff]
        %v458 = vld [vmem:[#allocation2 + $0x10] sm:$0xff]
        %v459 = vld [vmem:[#allocation2 + $0x18] sm:$0xff]
        %v460 = vld [vmem:[#allocation2 + $0x20] sm:$0xff]
        %v461 = vld [vmem:[#allocation2 + $0x28] sm:$0xff]
        %v462 = vld [vmem:[#allocation2 + $0x30] sm:$0xff]
        %v463 = vpack.c.bf16 %v452, %v451
        %v464 = vpack.c.bf16 %v458, %v457
        %v465 = vpack.c.bf16 %v454, %v453
        %v466 = vpack.c.bf16 %v460, %v459
        %v467 = vpack.c.bf16 %v456, %v455
        %v468 = vpack.c.bf16 %v462, %v461
        %v469 = vld [vmem:[#allocation5] sm:$0xf]
        %v470 = vld [vmem:[#allocation5 + $0x4] sm:$0xf]
        %v471 = vld [vmem:[#allocation5 + $0x8] sm:$0xf]
        %v472 = vld [vmem:[#allocation5 + $0xc] sm:$0xf]
        %v473 = vld [vmem:[#allocation5 + $0x10] sm:$0xf]
        %v474 = vld [vmem:[#allocation5 + $0x14] sm:$0xf]
        %v475 = vld [vmem:[#allocation5 + $0x18] sm:$0xf]
        %v476 = vld [vmem:[#allocation5 + $0x1c] sm:$0xf]
        %v477 = vld [vmem:[#allocation5 + $0x20] sm:$0xf]
        %v478 = vld [vmem:[#allocation5 + $0x24] sm:$0xf]
        %v479 = vld [vmem:[#allocation5 + $0x28] sm:$0xf]
        %v480 = vld [vmem:[#allocation5 + $0x2c] sm:$0xf]
        %v481 = vld [vmem:[#allocation5 + $0x30] sm:$0xf]
        %v482 = vld [vmem:[#allocation5 + $0x34] sm:$0xf]
        %v483 = vld [vmem:[#allocation5 + $0x38] sm:$0xf]
        %v484 = vld [vmem:[#allocation5 + $0x3c] sm:$0xf]
        %v485 = vld [vmem:[#allocation5 + $0x40] sm:$0xf]
        %v486 = vld [vmem:[#allocation5 + $0x44] sm:$0xf]
        %v487 = vld [vmem:[#allocation5 + $0x48] sm:$0xf]
        %v488 = vld [vmem:[#allocation5 + $0x4c] sm:$0xf]
        %v489 = vld [vmem:[#allocation5 + $0x50] sm:$0xf]
        %v490 = vld [vmem:[#allocation5 + $0x54] sm:$0xf]
        %v491 = vld [vmem:[#allocation5 + $0x58] sm:$0xf]
        %v492 = vld [vmem:[#allocation5 + $0x5c] sm:$0xf]
        %v493 = vld [vmem:[#allocation5 + $0x60] sm:$0xf]
        %v494 = vld [vmem:[#allocation5 + $0x64] sm:$0xf]
        %v495 = vld [vmem:[#allocation5 + $0x68] sm:$0xf]
        %v496 = vld [vmem:[#allocation5 + $0x6c] sm:$0xf]
        %v497 = vld [vmem:[#allocation5 + $0x70] sm:$0xf]
        %v498 = vld [vmem:[#allocation5 + $0x74] sm:$0xf]
        %v499 = vld [vmem:[#allocation5 + $0x78] sm:$0xf]
        %v500 = vld [vmem:[#allocation5 + $0x7c] sm:$0xf]
        %v501 = vld [vmem:[#allocation2 + $0x9] sm:$0xff]
        %v502 = vld [vmem:[#allocation2 + $0x11] sm:$0xff]
        %v503 = vld [vmem:[#allocation2 + $0x19] sm:$0xff]
        %v504 = vld [vmem:[#allocation2 + $0x21] sm:$0xff]
        %v505 = vld [vmem:[#allocation2 + $0x29] sm:$0xff]
        %v506 = vld [vmem:[#allocation2 + $0x31] sm:$0xff]
        %v507 = vpack.c.bf16 %v502, %v501
        %v508 = vpack.c.bf16 %v504, %v503
        %v509 = vpack.c.bf16 %v506, %v505
        %v510 = vld [vmem:[#allocation5 + $0x80] sm:$0xf]
        %v511 = vld [vmem:[#allocation5 + $0x84] sm:$0xf]
        %v512 = vld [vmem:[#allocation5 + $0x88] sm:$0xf]
        %v513 = vld [vmem:[#allocation5 + $0x8c] sm:$0xf]
        %v514 = vld [vmem:[#allocation5 + $0x90] sm:$0xf]
        %v515 = vld [vmem:[#allocation5 + $0x94] sm:$0xf]
        %v516 = vld [vmem:[#allocation5 + $0x98] sm:$0xf]
        %v517 = vld [vmem:[#allocation5 + $0x9c] sm:$0xf]
        %v518 = vld [vmem:[#allocation5 + $0xa0] sm:$0xf]
        %v519 = vld [vmem:[#allocation5 + $0xa4] sm:$0xf]
        %v520 = vld [vmem:[#allocation5 + $0xa8] sm:$0xf]
        %v521 = vld [vmem:[#allocation5 + $0xac] sm:$0xf]
        %v522 = vld [vmem:[#allocation5 + $0xb0] sm:$0xf]
        %v523 = vld [vmem:[#allocation5 + $0xb4] sm:$0xf]
        %v524 = vld [vmem:[#allocation5 + $0xb8] sm:$0xf]
        %v525 = vld [vmem:[#allocation5 + $0xbc] sm:$0xf]
        %v542 = vunpack.c.l.b16 %v510
        %v543 = vunpack.c.l.b16 %v511
        %v544 = vunpack.c.l.b16 %v512
        %v545 = vunpack.c.l.b16 %v513
        %v546 = vunpack.c.l.b16 %v514
        %v547 = vunpack.c.l.b16 %v515
        %v548 = vunpack.c.l.b16 %v516
        %v549 = vunpack.c.l.b16 %v517
        %v550 = vunpack.c.l.b16 %v518
        %v551 = vunpack.c.l.b16 %v519
        %v552 = vunpack.c.l.b16 %v520
        %v553 = vunpack.c.l.b16 %v521
        %v554 = vunpack.c.l.b16 %v522
        %v555 = vunpack.c.l.b16 %v523
        %v556 = vunpack.c.l.b16 %v524
        %v557 = vunpack.c.l.b16 %v525
        %v558 = vpack.c.b16 %v543, %v542
        %v559 = vpack.c.b16 %v545, %v544
        %v560 = vpack.c.b16 %v547, %v546
        %v561 = vpack.c.b16 %v549, %v548
        %v562 = vpack.c.b16 %v551, %v550
        %v563 = vpack.c.b16 %v553, %v552
        %v564 = vpack.c.b16 %v555, %v554
        %v565 = vpack.c.b16 %v557, %v556
        %574 = vmatpush.bf16.msra.mxu0 %v565
        %575 = vmatpush.bf16.msra.mxu0 %v564
        %576 = vmatpush.bf16.msra.mxu0 %v563
        %577 = vmatpush.bf16.msra.mxu0 %v562
        %578 = vmatpush.bf16.msra.mxu0 %v561
        %579 = vmatpush.bf16.msra.mxu0 %v560
        %580 = vmatpush.bf16.msra.mxu0 %v559
        %581 = vmatpush.bf16.msra.mxu0 %v558
        %582 = vmatmul.bf16.gmra.mxu0 %v507
        %v583 = vpop.f32.mrf.mxu0
        %v584 = vadd.f32 0.0, %v583
        %v585 = vpop.f32.mrf.mxu0
        %v586 = vadd.f32 0.0, %v585
        %587 = vmatmul.bf16.gmra.mxu0 %v508
        %v588 = vpop.f32.mrf.mxu0
        %v589 = vadd.f32 0.0, %v588
        %v590 = vpop.f32.mrf.mxu0
        %v591 = vadd.f32 0.0, %v590
        %592 = vmatmul.bf16.gmra.mxu0 %v509
        %v593 = vpop.f32.mrf.mxu0
        %v594 = vadd.f32 0.0, %v593
        %v595 = vpop.f32.mrf.mxu0
        %v596 = vadd.f32 0.0, %v595
        %597 = vdwg.mxu0
        %v630 = vunpack.c.l.b16 %v469
        %v631 = vunpack.c.l.b16 %v470
        %v632 = vunpack.c.l.b16 %v471
        %v633 = vunpack.c.l.b16 %v472
        %v634 = vunpack.c.l.b16 %v473
        %v635 = vunpack.c.l.b16 %v474
        %v636 = vunpack.c.l.b16 %v475
        %v637 = vunpack.c.l.b16 %v476
        %v638 = vunpack.c.l.b16 %v477
        %v639 = vunpack.c.l.b16 %v478
        %v640 = vunpack.c.l.b16 %v479
        %v641 = vunpack.c.l.b16 %v480
        %v642 = vunpack.c.l.b16 %v481
        %v643 = vunpack.c.l.b16 %v482
        %v644 = vunpack.c.l.b16 %v483
        %v645 = vunpack.c.l.b16 %v484
        %v646 = vunpack.c.l.b16 %v485
        %v647 = vunpack.c.l.b16 %v486
        %v648 = vunpack.c.l.b16 %v487
        %v649 = vunpack.c.l.b16 %v488
        %v650 = vunpack.c.l.b16 %v489
        %v651 = vunpack.c.l.b16 %v490
        %v652 = vunpack.c.l.b16 %v491
        %v653 = vunpack.c.l.b16 %v492
        %v654 = vunpack.c.l.b16 %v493
        %v655 = vunpack.c.l.b16 %v494
        %v656 = vunpack.c.l.b16 %v495
        %v657 = vunpack.c.l.b16 %v496
        %v658 = vunpack.c.l.b16 %v497
        %v659 = vunpack.c.l.b16 %v498
        %v660 = vunpack.c.l.b16 %v499
        %v661 = vunpack.c.l.b16 %v500
        %v662 = vpack.c.b16 %v631, %v630
        %v663 = vpack.c.b16 %v633, %v632
        %v664 = vpack.c.b16 %v635, %v634
        %v665 = vpack.c.b16 %v637, %v636
        %v666 = vpack.c.b16 %v639, %v638
        %v667 = vpack.c.b16 %v641, %v640
        %v668 = vpack.c.b16 %v643, %v642
        %v669 = vpack.c.b16 %v645, %v644
        %v670 = vpack.c.b16 %v647, %v646
        %v671 = vpack.c.b16 %v649, %v648
        %v672 = vpack.c.b16 %v651, %v650
        %v673 = vpack.c.b16 %v653, %v652
        %v674 = vpack.c.b16 %v655, %v654
        %v675 = vpack.c.b16 %v657, %v656
        %v676 = vpack.c.b16 %v659, %v658
        %v677 = vpack.c.b16 %v661, %v660
        %694 = vmatpush.bf16.msra.mxu0 %v669
        %695 = vmatpush.bf16.msra.mxu0 %v668
        %696 = vmatpush.bf16.msra.mxu0 %v667
        %697 = vmatpush.bf16.msra.mxu0 %v666
        %698 = vmatpush.bf16.msra.mxu0 %v665
        %699 = vmatpush.bf16.msra.mxu0 %v664
        %700 = vmatpush.bf16.msra.mxu0 %v663
        %701 = vmatpush.bf16.msra.mxu0 %v662
        %702 = vmatmul.bf16.gmra.mxu0 %v463
        %v703 = vpop.f32.mrf.mxu0
        %v704 = vadd.f32 %v584, %v703
        %v705 = vpop.f32.mrf.mxu0
        %v706 = vadd.f32 %v586, %v705
        %707 = vmatmul.bf16.gmra.mxu0 %v465
        %v708 = vpop.f32.mrf.mxu0
        %v709 = vadd.f32 %v589, %v708
        %v710 = vpop.f32.mrf.mxu0
        %v711 = vadd.f32 %v591, %v710
        %712 = vmatmul.bf16.gmra.mxu0 %v467
        %v713 = vpop.f32.mrf.mxu0
        %v714 = vadd.f32 %v594, %v713
        %v715 = vpop.f32.mrf.mxu0
        %v716 = vadd.f32 %v596, %v715
        %717 = vdwg.mxu0
        %718 = vmatpush.bf16.msra.mxu0 %v677
        %719 = vmatpush.bf16.msra.mxu0 %v676
        %720 = vmatpush.bf16.msra.mxu0 %v675
        %721 = vmatpush.bf16.msra.mxu0 %v674
        %722 = vmatpush.bf16.msra.mxu0 %v673
        %723 = vmatpush.bf16.msra.mxu0 %v672
        %724 = vmatpush.bf16.msra.mxu0 %v671
        %725 = vmatpush.bf16.msra.mxu0 %v670
        %726 = vmatmul.bf16.gmra.mxu0 %v464
        %v727 = vpop.f32.mrf.mxu0
        %v728 = vadd.f32 %v704, %v727
        %v729 = vpop.f32.mrf.mxu0
        %v730 = vadd.f32 %v706, %v729
        %731 = vmatmul.bf16.gmra.mxu0 %v466
        %v732 = vpop.f32.mrf.mxu0
        %v733 = vadd.f32 %v709, %v732
        %v734 = vpop.f32.mrf.mxu0
        %v735 = vadd.f32 %v711, %v734
        %736 = vmatmul.bf16.gmra.mxu0 %v468
        %v737 = vpop.f32.mrf.mxu0
        %v738 = vadd.f32 %v714, %v737
        %v739 = vpop.f32.mrf.mxu0
        %v740 = vadd.f32 %v716, %v739
        %741 = vdwg.mxu0
        %v742 = vld [vmem:[%s4] sm:$0x1]
        %v744 = vperm.slane %v742, 0
        %v746 = vadd.f32 %v728, %v744
        %v747 = vadd.f32 %v730, %v744
        %v748 = vadd.f32 %v733, %v744
        %v749 = vadd.f32 %v735, %v744
        %v750 = vadd.f32 %v738, %v744
        %v751 = vadd.f32 %v740, %v744
        %v752 = vmax.f32 %v746, 0.0
        %v753 = vmax.f32 %v747, 0.0
        %v754 = vmax.f32 %v748, 0.0
        %v755 = vmax.f32 %v749, 0.0
        %v756 = vmax.f32 %v750, 0.0
        %v757 = vmax.f32 %v751, 0.0
        %758 = vst [vmem:[#allocation3] sm:$0xff] %v752
        %759 = vst [vmem:[#allocation3 + $0x8] sm:$0xff] %v753
        %760 = vst [vmem:[#allocation3 + $0x10] sm:$0xff] %v754
        %761 = vst [vmem:[#allocation3 + $0x18] sm:$0xff] %v755
        %762 = vst [vmem:[#allocation3 + $0x20] sm:$0xff] %v756
        %763 = vst [vmem:[#allocation3 + $0x28] sm:$0xff] %v757
        // Predicated region
        $region65: #{tpu_custom_call.1} parent=47 // pred_check
          %p764 = pneg %p439
        $region66: #{tpu_custom_call.1} parent=47 // pred_check_branch
          %766 = sbr.rel (%p764) target = $region68
        $region67: #{tpu_custom_call.1} parent=47 // pred_region
          %767 = vst [vmem:[#allocation3] sm:$0xff] 0.0
        $region68: #{tpu_custom_call.1} parent=47 // pred_fallthru
          _
        // Predicated region
        $region69: #{tpu_custom_call.1} parent=47 // pred_check
          %p768 = pneg %p445
        $region70: #{tpu_custom_call.1} parent=47 // pred_check_branch
          %770 = sbr.rel (%p768) target = $region72
        $region71: #{tpu_custom_call.1} parent=47 // pred_region
          %771 = vst [vmem:[#allocation3 + $0x28] sm:$0xff] 0.0
        $region72: #{tpu_custom_call.1} parent=47 // pred_fallthru
          _
        %v772 = vld [vmem:[#allocation3 + $0x6] sm:$0xff]
        %v773 = vld [vmem:[#allocation3 + $0xe] sm:$0xff]
        %v774 = vld [vmem:[#allocation3 + $0x16] sm:$0xff]
        %v775 = vld [vmem:[#allocation3 + $0x1e] sm:$0xff]
        %v776 = vld [vmem:[#allocation3 + $0x7] sm:$0xff]
        %v777 = vld [vmem:[#allocation3 + $0xf] sm:$0xff]
        %v778 = vld [vmem:[#allocation3 + $0x17] sm:$0xff]
        %v779 = vld [vmem:[#allocation3 + $0x1f] sm:$0xff]
        %v780 = vpack.c.bf16 %v773, %v772
        %v781 = vpack.c.bf16 %v777, %v776
        %v782 = vpack.c.bf16 %v775, %v774
        %v783 = vpack.c.bf16 %v779, %v778
        %v784 = vld [vmem:[#allocation8] sm:$0xf]
        %v785 = vld [vmem:[#allocation8 + $0x4] sm:$0xf]
        %v786 = vld [vmem:[#allocation8 + $0x8] sm:$0xf]
        %v787 = vld [vmem:[#allocation8 + $0xc] sm:$0xf]
        %v788 = vld [vmem:[#allocation8 + $0x10] sm:$0xf]
        %v789 = vld [vmem:[#allocation8 + $0x14] sm:$0xf]
        %v790 = vld [vmem:[#allocation8 + $0x18] sm:$0xf]
        %v791 = vld [vmem:[#allocation8 + $0x1c] sm:$0xf]
        %v792 = vld [vmem:[#allocation8 + $0x20] sm:$0xf]
        %v793 = vld [vmem:[#allocation8 + $0x24] sm:$0xf]
        %v794 = vld [vmem:[#allocation8 + $0x28] sm:$0xf]
        %v795 = vld [vmem:[#allocation8 + $0x2c] sm:$0xf]
        %v796 = vld [vmem:[#allocation8 + $0x30] sm:$0xf]
        %v797 = vld [vmem:[#allocation8 + $0x34] sm:$0xf]
        %v798 = vld [vmem:[#allocation8 + $0x38] sm:$0xf]
        %v799 = vld [vmem:[#allocation8 + $0x3c] sm:$0xf]
        %v800 = vld [vmem:[#allocation8 + $0x40] sm:$0xf]
        %v801 = vld [vmem:[#allocation8 + $0x44] sm:$0xf]
        %v802 = vld [vmem:[#allocation8 + $0x48] sm:$0xf]
        %v803 = vld [vmem:[#allocation8 + $0x4c] sm:$0xf]
        %v804 = vld [vmem:[#allocation8 + $0x50] sm:$0xf]
        %v805 = vld [vmem:[#allocation8 + $0x54] sm:$0xf]
        %v806 = vld [vmem:[#allocation8 + $0x58] sm:$0xf]
        %v807 = vld [vmem:[#allocation8 + $0x5c] sm:$0xf]
        %v808 = vld [vmem:[#allocation8 + $0x60] sm:$0xf]
        %v809 = vld [vmem:[#allocation8 + $0x64] sm:$0xf]
        %v810 = vld [vmem:[#allocation8 + $0x68] sm:$0xf]
        %v811 = vld [vmem:[#allocation8 + $0x6c] sm:$0xf]
        %v812 = vld [vmem:[#allocation8 + $0x70] sm:$0xf]
        %v813 = vld [vmem:[#allocation8 + $0x74] sm:$0xf]
        %v814 = vld [vmem:[#allocation8 + $0x78] sm:$0xf]
        %v815 = vld [vmem:[#allocation8 + $0x7c] sm:$0xf]
        %v816 = vld [vmem:[#allocation3 + $0x8] sm:$0xff]
        %v817 = vld [vmem:[#allocation3 + $0x10] sm:$0xff]
        %v818 = vld [vmem:[#allocation3 + $0x18] sm:$0xff]
        %v819 = vld [vmem:[#allocation3 + $0x20] sm:$0xff]
        %v820 = vld [vmem:[#allocation3 + $0x9] sm:$0xff]
        %v821 = vld [vmem:[#allocation3 + $0x11] sm:$0xff]
        %v822 = vld [vmem:[#allocation3 + $0x19] sm:$0xff]
        %v823 = vld [vmem:[#allocation3 + $0x21] sm:$0xff]
        %v824 = vpack.c.bf16 %v817, %v816
        %v825 = vpack.c.bf16 %v821, %v820
        %v826 = vpack.c.bf16 %v819, %v818
        %v827 = vpack.c.bf16 %v823, %v822
        %v828 = vld [vmem:[#allocation8 + $0x80] sm:$0xf]
        %v829 = vld [vmem:[#allocation8 + $0x84] sm:$0xf]
        %v830 = vld [vmem:[#allocation8 + $0x88] sm:$0xf]
        %v831 = vld [vmem:[#allocation8 + $0x8c] sm:$0xf]
        %v832 = vld [vmem:[#allocation8 + $0x90] sm:$0xf]
        %v833 = vld [vmem:[#allocation8 + $0x94] sm:$0xf]
        %v834 = vld [vmem:[#allocation8 + $0x98] sm:$0xf]
        %v835 = vld [vmem:[#allocation8 + $0x9c] sm:$0xf]
        %v836 = vld [vmem:[#allocation8 + $0xa0] sm:$0xf]
        %v837 = vld [vmem:[#allocation8 + $0xa4] sm:$0xf]
        %v838 = vld [vmem:[#allocation8 + $0xa8] sm:$0xf]
        %v839 = vld [vmem:[#allocation8 + $0xac] sm:$0xf]
        %v840 = vld [vmem:[#allocation8 + $0xb0] sm:$0xf]
        %v841 = vld [vmem:[#allocation8 + $0xb4] sm:$0xf]
        %v842 = vld [vmem:[#allocation8 + $0xb8] sm:$0xf]
        %v843 = vld [vmem:[#allocation8 + $0xbc] sm:$0xf]
        %v844 = vld [vmem:[#allocation8 + $0xc0] sm:$0xf]
        %v845 = vld [vmem:[#allocation8 + $0xc4] sm:$0xf]
        %v846 = vld [vmem:[#allocation8 + $0xc8] sm:$0xf]
        %v847 = vld [vmem:[#allocation8 + $0xcc] sm:$0xf]
        %v848 = vld [vmem:[#allocation8 + $0xd0] sm:$0xf]
        %v849 = vld [vmem:[#allocation8 + $0xd4] sm:$0xf]
        %v850 = vld [vmem:[#allocation8 + $0xd8] sm:$0xf]
        %v851 = vld [vmem:[#allocation8 + $0xdc] sm:$0xf]
        %v852 = vld [vmem:[#allocation8 + $0xe0] sm:$0xf]
        %v853 = vld [vmem:[#allocation8 + $0xe4] sm:$0xf]
        %v854 = vld [vmem:[#allocation8 + $0xe8] sm:$0xf]
        %v855 = vld [vmem:[#allocation8 + $0xec] sm:$0xf]
        %v856 = vld [vmem:[#allocation8 + $0xf0] sm:$0xf]
        %v857 = vld [vmem:[#allocation8 + $0xf4] sm:$0xf]
        %v858 = vld [vmem:[#allocation8 + $0xf8] sm:$0xf]
        %v859 = vld [vmem:[#allocation8 + $0xfc] sm:$0xf]
        %v892 = vunpack.c.l.b16 %v828
        %v893 = vunpack.c.l.b16 %v829
        %v894 = vunpack.c.l.b16 %v830
        %v895 = vunpack.c.l.b16 %v831
        %v896 = vunpack.c.l.b16 %v832
        %v897 = vunpack.c.l.b16 %v833
        %v898 = vunpack.c.l.b16 %v834
        %v899 = vunpack.c.l.b16 %v835
        %v900 = vunpack.c.l.b16 %v836
        %v901 = vunpack.c.l.b16 %v837
        %v902 = vunpack.c.l.b16 %v838
        %v903 = vunpack.c.l.b16 %v839
        %v904 = vunpack.c.l.b16 %v840
        %v905 = vunpack.c.l.b16 %v841
        %v906 = vunpack.c.l.b16 %v842
        %v907 = vunpack.c.l.b16 %v843
        %v908 = vunpack.c.l.b16 %v844
        %v909 = vunpack.c.l.b16 %v845
        %v910 = vunpack.c.l.b16 %v846
        %v911 = vunpack.c.l.b16 %v847
        %v912 = vunpack.c.l.b16 %v848
        %v913 = vunpack.c.l.b16 %v849
        %v914 = vunpack.c.l.b16 %v850
        %v915 = vunpack.c.l.b16 %v851
        %v916 = vunpack.c.l.b16 %v852
        %v917 = vunpack.c.l.b16 %v853
        %v918 = vunpack.c.l.b16 %v854
        %v919 = vunpack.c.l.b16 %v855
        %v920 = vunpack.c.l.b16 %v856
        %v921 = vunpack.c.l.b16 %v857
        %v922 = vunpack.c.l.b16 %v858
        %v923 = vunpack.c.l.b16 %v859
        %v924 = vpack.c.b16 %v893, %v892
        %v925 = vpack.c.b16 %v895, %v894
        %v926 = vpack.c.b16 %v897, %v896
        %v927 = vpack.c.b16 %v899, %v898
        %v928 = vpack.c.b16 %v901, %v900
        %v929 = vpack.c.b16 %v903, %v902
        %v930 = vpack.c.b16 %v905, %v904
        %v931 = vpack.c.b16 %v907, %v906
        %v932 = vpack.c.b16 %v909, %v908
        %v933 = vpack.c.b16 %v911, %v910
        %v934 = vpack.c.b16 %v913, %v912
        %v935 = vpack.c.b16 %v915, %v914
        %v936 = vpack.c.b16 %v917, %v916
        %v937 = vpack.c.b16 %v919, %v918
        %v938 = vpack.c.b16 %v921, %v920
        %v939 = vpack.c.b16 %v923, %v922
        %956 = vmatpush.bf16.msra.mxu0 %v931
        %957 = vmatpush.bf16.msra.mxu0 %v930
        %958 = vmatpush.bf16.msra.mxu0 %v929
        %959 = vmatpush.bf16.msra.mxu0 %v928
        %960 = vmatpush.bf16.msra.mxu0 %v927
        %961 = vmatpush.bf16.msra.mxu0 %v926
        %962 = vmatpush.bf16.msra.mxu0 %v925
        %963 = vmatpush.bf16.msra.mxu0 %v924
        %964 = vmatmul.bf16.gmra.mxu0 %v824
        %v965 = vpop.f32.mrf.mxu0
        %v966 = vadd.f32 0.0, %v965
        %v967 = vpop.f32.mrf.mxu0
        %v968 = vadd.f32 0.0, %v967
        %969 = vmatmul.bf16.gmra.mxu0 %v826
        %v970 = vpop.f32.mrf.mxu0
        %v971 = vadd.f32 0.0, %v970
        %v972 = vpop.f32.mrf.mxu0
        %v973 = vadd.f32 0.0, %v972
        %974 = vdwg.mxu0
        %975 = vmatpush.bf16.msra.mxu0 %v939
        %976 = vmatpush.bf16.msra.mxu0 %v938
        %977 = vmatpush.bf16.msra.mxu0 %v937
        %978 = vmatpush.bf16.msra.mxu0 %v936
        %979 = vmatpush.bf16.msra.mxu0 %v935
        %980 = vmatpush.bf16.msra.mxu0 %v934
        %981 = vmatpush.bf16.msra.mxu0 %v933
        %982 = vmatpush.bf16.msra.mxu0 %v932
        %983 = vmatmul.bf16.gmra.mxu0 %v825
        %v984 = vpop.f32.mrf.mxu0
        %v985 = vadd.f32 %v966, %v984
        %v986 = vpop.f32.mrf.mxu0
        %v987 = vadd.f32 %v968, %v986
        %988 = vmatmul.bf16.gmra.mxu0 %v827
        %v989 = vpop.f32.mrf.mxu0
        %v990 = vadd.f32 %v971, %v989
        %v991 = vpop.f32.mrf.mxu0
        %v992 = vadd.f32 %v973, %v991
        %993 = vdwg.mxu0
        %v1026 = vunpack.c.l.b16 %v784
        %v1027 = vunpack.c.l.b16 %v785
        %v1028 = vunpack.c.l.b16 %v786
        %v1029 = vunpack.c.l.b16 %v787
        %v1030 = vunpack.c.l.b16 %v788
        %v1031 = vunpack.c.l.b16 %v789
        %v1032 = vunpack.c.l.b16 %v790
        %v1033 = vunpack.c.l.b16 %v791
        %v1034 = vunpack.c.l.b16 %v792
        %v1035 = vunpack.c.l.b16 %v793
        %v1036 = vunpack.c.l.b16 %v794
        %v1037 = vunpack.c.l.b16 %v795
        %v1038 = vunpack.c.l.b16 %v796
        %v1039 = vunpack.c.l.b16 %v797
        %v1040 = vunpack.c.l.b16 %v798
        %v1041 = vunpack.c.l.b16 %v799
        %v1042 = vunpack.c.l.b16 %v800
        %v1043 = vunpack.c.l.b16 %v801
        %v1044 = vunpack.c.l.b16 %v802
        %v1045 = vunpack.c.l.b16 %v803
        %v1046 = vunpack.c.l.b16 %v804
        %v1047 = vunpack.c.l.b16 %v805
        %v1048 = vunpack.c.l.b16 %v806
        %v1049 = vunpack.c.l.b16 %v807
        %v1050 = vunpack.c.l.b16 %v808
        %v1051 = vunpack.c.l.b16 %v809
        %v1052 = vunpack.c.l.b16 %v810
        %v1053 = vunpack.c.l.b16 %v811
        %v1054 = vunpack.c.l.b16 %v812
        %v1055 = vunpack.c.l.b16 %v813
        %v1056 = vunpack.c.l.b16 %v814
        %v1057 = vunpack.c.l.b16 %v815
        %v1058 = vpack.c.b16 %v1027, %v1026
        %v1059 = vpack.c.b16 %v1029, %v1028
        %v1060 = vpack.c.b16 %v1031, %v1030
        %v1061 = vpack.c.b16 %v1033, %v1032
        %v1062 = vpack.c.b16 %v1035, %v1034
        %v1063 = vpack.c.b16 %v1037, %v1036
        %v1064 = vpack.c.b16 %v1039, %v1038
        %v1065 = vpack.c.b16 %v1041, %v1040
        %v1066 = vpack.c.b16 %v1043, %v1042
        %v1067 = vpack.c.b16 %v1045, %v1044
        %v1068 = vpack.c.b16 %v1047, %v1046
        %v1069 = vpack.c.b16 %v1049, %v1048
        %v1070 = vpack.c.b16 %v1051, %v1050
        %v1071 = vpack.c.b16 %v1053, %v1052
        %v1072 = vpack.c.b16 %v1055, %v1054
        %v1073 = vpack.c.b16 %v1057, %v1056
        %1090 = vmatpush.bf16.msra.mxu0 %v1065
        %1091 = vmatpush.bf16.msra.mxu0 %v1064
        %1092 = vmatpush.bf16.msra.mxu0 %v1063
        %1093 = vmatpush.bf16.msra.mxu0 %v1062
        %1094 = vmatpush.bf16.msra.mxu0 %v1061
        %1095 = vmatpush.bf16.msra.mxu0 %v1060
        %1096 = vmatpush.bf16.msra.mxu0 %v1059
        %1097 = vmatpush.bf16.msra.mxu0 %v1058
        %1098 = vmatmul.bf16.gmra.mxu0 %v780
        %v1099 = vpop.f32.mrf.mxu0
        %v1100 = vadd.f32 %v985, %v1099
        %v1101 = vpop.f32.mrf.mxu0
        %v1102 = vadd.f32 %v987, %v1101
        %1103 = vmatmul.bf16.gmra.mxu0 %v782
        %v1104 = vpop.f32.mrf.mxu0
        %v1105 = vadd.f32 %v990, %v1104
        %v1106 = vpop.f32.mrf.mxu0
        %v1107 = vadd.f32 %v992, %v1106
        %1108 = vdwg.mxu0
        %1109 = vmatpush.bf16.msra.mxu0 %v1073
        %1110 = vmatpush.bf16.msra.mxu0 %v1072
        %1111 = vmatpush.bf16.msra.mxu0 %v1071
        %1112 = vmatpush.bf16.msra.mxu0 %v1070
        %1113 = vmatpush.bf16.msra.mxu0 %v1069
        %1114 = vmatpush.bf16.msra.mxu0 %v1068
        %1115 = vmatpush.bf16.msra.mxu0 %v1067
        %1116 = vmatpush.bf16.msra.mxu0 %v1066
        %1117 = vmatmul.bf16.gmra.mxu0 %v781
        %v1118 = vpop.f32.mrf.mxu0
        %v1119 = vadd.f32 %v1100, %v1118
        %v1120 = vpop.f32.mrf.mxu0
        %v1121 = vadd.f32 %v1102, %v1120
        %1122 = vmatmul.bf16.gmra.mxu0 %v783
        %v1123 = vpop.f32.mrf.mxu0
        %v1124 = vadd.f32 %v1105, %v1123
        %v1125 = vpop.f32.mrf.mxu0
        %v1126 = vadd.f32 %v1107, %v1125
        %1127 = vdwg.mxu0
        %v1128 = vld [vmem:[#allocation3 + $0xa] sm:$0xff]
        %v1129 = vld [vmem:[#allocation3 + $0x12] sm:$0xff]
        %v1130 = vld [vmem:[#allocation3 + $0x1a] sm:$0xff]
        %v1131 = vld [vmem:[#allocation3 + $0x22] sm:$0xff]
        %v1132 = vpack.c.bf16 %v1129, %v1128
        %v1133 = vpack.c.bf16 %v1131, %v1130
        %v1134 = vld [vmem:[#allocation8 + $0x100] sm:$0xf]
        %v1135 = vld [vmem:[#allocation8 + $0x104] sm:$0xf]
        %v1136 = vld [vmem:[#allocation8 + $0x108] sm:$0xf]
        %v1137 = vld [vmem:[#allocation8 + $0x10c] sm:$0xf]
        %v1138 = vld [vmem:[#allocation8 + $0x110] sm:$0xf]
        %v1139 = vld [vmem:[#allocation8 + $0x114] sm:$0xf]
        %v1140 = vld [vmem:[#allocation8 + $0x118] sm:$0xf]
        %v1141 = vld [vmem:[#allocation8 + $0x11c] sm:$0xf]
        %v1142 = vld [vmem:[#allocation8 + $0x120] sm:$0xf]
        %v1143 = vld [vmem:[#allocation8 + $0x124] sm:$0xf]
        %v1144 = vld [vmem:[#allocation8 + $0x128] sm:$0xf]
        %v1145 = vld [vmem:[#allocation8 + $0x12c] sm:$0xf]
        %v1146 = vld [vmem:[#allocation8 + $0x130] sm:$0xf]
        %v1147 = vld [vmem:[#allocation8 + $0x134] sm:$0xf]
        %v1148 = vld [vmem:[#allocation8 + $0x138] sm:$0xf]
        %v1149 = vld [vmem:[#allocation8 + $0x13c] sm:$0xf]
        %v1166 = vunpack.c.l.b16 %v1134
        %v1167 = vunpack.c.l.b16 %v1135
        %v1168 = vunpack.c.l.b16 %v1136
        %v1169 = vunpack.c.l.b16 %v1137
        %v1170 = vunpack.c.l.b16 %v1138
        %v1171 = vunpack.c.l.b16 %v1139
        %v1172 = vunpack.c.l.b16 %v1140
        %v1173 = vunpack.c.l.b16 %v1141
        %v1174 = vunpack.c.l.b16 %v1142
        %v1175 = vunpack.c.l.b16 %v1143
        %v1176 = vunpack.c.l.b16 %v1144
        %v1177 = vunpack.c.l.b16 %v1145
        %v1178 = vunpack.c.l.b16 %v1146
        %v1179 = vunpack.c.l.b16 %v1147
        %v1180 = vunpack.c.l.b16 %v1148
        %v1181 = vunpack.c.l.b16 %v1149
        %v1182 = vpack.c.b16 %v1167, %v1166
        %v1183 = vpack.c.b16 %v1169, %v1168
        %v1184 = vpack.c.b16 %v1171, %v1170
        %v1185 = vpack.c.b16 %v1173, %v1172
        %v1186 = vpack.c.b16 %v1175, %v1174
        %v1187 = vpack.c.b16 %v1177, %v1176
        %v1188 = vpack.c.b16 %v1179, %v1178
        %v1189 = vpack.c.b16 %v1181, %v1180
        %1198 = vmatpush.bf16.msra.mxu0 %v1189
        %1199 = vmatpush.bf16.msra.mxu0 %v1188
        %1200 = vmatpush.bf16.msra.mxu0 %v1187
        %1201 = vmatpush.bf16.msra.mxu0 %v1186
        %1202 = vmatpush.bf16.msra.mxu0 %v1185
        %1203 = vmatpush.bf16.msra.mxu0 %v1184
        %1204 = vmatpush.bf16.msra.mxu0 %v1183
        %1205 = vmatpush.bf16.msra.mxu0 %v1182
        %1206 = vmatmul.bf16.gmra.mxu0 %v1132
        %v1207 = vpop.f32.mrf.mxu0
        %v1208 = vadd.f32 0.0, %v1207
        %v1209 = vpop.f32.mrf.mxu0
        %v1210 = vadd.f32 0.0, %v1209
        %1211 = vmatmul.bf16.gmra.mxu0 %v1133
        %v1212 = vpop.f32.mrf.mxu0
        %v1213 = vadd.f32 0.0, %v1212
        %v1214 = vpop.f32.mrf.mxu0
        %v1215 = vadd.f32 0.0, %v1214
        %1216 = vdwg.mxu0
        %v1217 = vadd.f32 %v1119, %v1208
        %v1218 = vadd.f32 %v1121, %v1210
        %v1219 = vadd.f32 %v1124, %v1213
        %v1220 = vadd.f32 %v1126, %v1215
        %v1221 = vld [vmem:[%s6] sm:$0x1]
        %v1223 = vperm.slane %v1221, 0
        %v1225 = vadd.f32 %v1217, %v1223
        %v1226 = vadd.f32 %v1218, %v1223
        %v1227 = vadd.f32 %v1219, %v1223
        %v1228 = vadd.f32 %v1220, %v1223
        %v1229 = vmax.f32 %v1225, 0.0
        %v1230 = vmax.f32 %v1226, 0.0
        %v1231 = vmax.f32 %v1227, 0.0
        %v1232 = vmax.f32 %v1228, 0.0
        // Predicated region
        $region73: #{tpu_custom_call.1} parent=47 // pred_check
          %p1233 = pneg %p439
        $region74: #{tpu_custom_call.1} parent=47 // pred_check_branch
          %1235 = sbr.rel (%p1233) target = $region76
        $region75: #{tpu_custom_call.1} parent=47 // pred_region
          %1236 = vst [vmem:[#allocation4] sm:$0x1] 0.0
        $region76: #{tpu_custom_call.1} parent=47 // pred_fallthru
          _
        %v1237 = vld [vmem:[#allocation4] sm:$0x1]
        %v1238 = vadd.f32 %v1229, %v1230
        %v1239 = vadd.f32 %v1238, %v1231
        %v1240 = vadd.f32 %v1239, %v1232
        %v1241 = vrot.slane %v1240, 4
        %v1242 = vadd.f32 %v1240, %v1241
        %v1243 = vrot.slane %v1242, 2
        %v1244 = vadd.f32 %v1242, %v1243
        %v1245 = vrot.slane %v1244, 1
        %v1246 = vadd.f32 %v1244, %v1245
        %v1247 = vadd.f32 %v1237, %v1246
        %1248 = vst [vmem:[#allocation4] sm:$0x1] %v1247
        // Predicated region
        $region77: #{tpu_custom_call.1} parent=47 // pred_check
          %p1249 = pneg %p445
        $region78: #{tpu_custom_call.1} parent=47 // pred_check_branch
          %1251 = sbr.rel (%p1249) target = $region80
        $region79: #{tpu_custom_call.1} parent=47 // pred_region
          %v1252 = vld [vmem:[#allocation4] sm:$0x1]
          %v1253 = vmul.f32 %v1252, 0.010416667
          %1254 = vst [vmem:[%s326] sm:$0x1] %v1253
        $region80: #{tpu_custom_call.1} parent=47 // pred_fallthru
          _
        %s1255 = sand.u32 %s197, 1
        %s1256 = scalar_lea.sflag [#allocation7], %s1255
        %s1257 = sand.u32 %s197, 1
        %s1258 = scalar_lea.vmem [#allocation10], %s1257
        // Predicated region
        $region81: #{tpu_custom_call.1} parent=47 // pred_check
          %p1259 = pneg %p207
        $region82: #{tpu_custom_call.1} parent=47 // pred_check_branch
          %1261 = sbr.rel (%p1259) target = $region84
        $region83: #{tpu_custom_call.1} parent=47 // pred_region
          %1263 = vsyncadd %s1256, 0
          %s1264 = scalar_lea.hbm %s7, %s27
          %s1266 = sshll.u32 %s1258, 4
          %s1267 = int_to_ptr.vmem [resolvable:$true] %s1266
          %s1268 = sshll.u32 %s1264, 4
          %s1269 = int_to_ptr.hbm [resolvable:$true] %s1268
          %1271 = dma.vmem_to_hbm [thread:$0]  %s1267, 16, %s1269, %s1256
        $region84: #{tpu_custom_call.1} parent=47 // pred_fallthru
          _
      $region48: #{tpu_custom_call.1} parent=5 // pred_fallthru
        _
      %p1272 = scmp.le.s32.totalorder 2, %s18
      // Predicated region
      $region85: #{tpu_custom_call.1} parent=5 // pred_check
        %p1273 = pneg %p1272
      $region86: #{tpu_custom_call.1} parent=5 // pred_check_branch
        %1275 = sbr.rel (%p1273) target = $region88
      $region87: #{tpu_custom_call.1} parent=5 // pred_region
        %s1276 = ssub.s32 %s18, 2
        // Predicated region
        $region89: #{tpu_custom_call.1} parent=87 // pred_check
          %p1277 = pneg %p213
        $region90: #{tpu_custom_call.1} parent=87 // pred_check_branch
          %1279 = sbr.rel (%p1277) target = $region92
        $region91: #{tpu_custom_call.1} parent=87 // pred_region
          %s1280 = sand.u32 %s198, 1
          %s1281 = scalar_lea.sflag [#allocation7], %s1280
          %s1282 = sand.u32 %s198, 1
          %s1283 = scalar_lea.vmem [#allocation10], %s1282
          %1285 = dma.done %s1281, 16
        $region92: #{tpu_custom_call.1} parent=87 // pred_fallthru
          _
      $region88: #{tpu_custom_call.1} parent=5 // pred_fallthru
        _
    $region6: #{tpu_custom_call.1} parent=1 // loop_footer
      %s22 = sadd.s32 1, %s18
    $region7: #{tpu_custom_call.1} parent=1 // loop_footer_branch
      %17 = sbr.rel target = $region3
    $region8: #{tpu_custom_call.1} parent=1 // loop_exit
      _
    %1286 = vsyncpa [#allocation6], 1
    %s1287 = scalar_lea.sflag [#allocation6], 1
    %1288 = vsyncpa %s1287, 1
    %1289 = vsyncpa [#allocation9], 1
    %1290 = vsyncpa [#allocation7], 1
    %s1291 = scalar_lea.sflag [#allocation7], 1
    %1292 = vsyncpa %s1291, 1

</llo_original>
